<compile_context>
chip_gen: v7x
topology: tpu7x:2x2x1
jax: 0.10.0
libtpu: 0.0.40
codegen_flags: <defaults>
</compile_context>

<pallas_src>
import functools

import jax
import jax.numpy as jnp
from jax.experimental import pallas as pl
from jax.experimental.pallas import tpu as pltpu


def _round_up(x, m):
    return (x + m - 1) // m * m


_VMEM_LIMIT_BYTES = 48 * 1024 * 1024      # fits v7x (64 MiB) and v5e/v6e (128 MiB)
_SINGLE_SHOT_BUDGET = 36 * 1024 * 1024    # stay well under the limit above


# ---------------------------------------------------------------------------
# Kernels
# ---------------------------------------------------------------------------
def _gcn_kernel_single(adj_ref, xw_ref, out_ref):
    """One row block, whole contraction in one shot (no K loop, no scratch).

    adj_ref : [TM, N]    adjacency row slab (streamed from HBM exactly once)
    xw_ref  : [N, C_P]   VMEM-resident RHS: col 0 = ones, cols 1..out = X @ W
    out_ref : [TM, C_P]  lane-dense output block
    """
    res = jnp.dot(adj_ref[...], xw_ref[...], preferred_element_type=jnp.float32)
    # Column 0 of the RHS is all ones -> res[:, 0:1] is rowsum(adj) for free.
    inv = pl.reciprocal(res[:, 0:1], approx=False)   # exact; rowsum > 0 assumed
    out_ref[...] = (res * inv).astype(out_ref.dtype)


def _gcn_kernel_ktiled(adj_ref, xw_ref, out_ref, acc_ref, *, tk, n):
    """Large-N fallback: (row block i, K block k) with a [TM, C_P] accumulator."""
    k = pl.program_id(1)

    @pl.when(k == 0)
    def _init():
        acc_ref[...] = jnp.zeros_like(acc_ref)

    adj = adj_ref[...]
    if n % tk != 0:
        # adj is streamed unpadded; zero the out-of-bounds columns of the
        # ragged tail K tile (the matching RHS rows are zero-padded as well).
        col = jax.lax.broadcasted_iota(jnp.int32, adj.shape, 1) + k * tk
        adj = jnp.where(col < n, adj, 0.0)
    acc_ref[...] += jnp.dot(adj, xw_ref[...], preferred_element_type=jnp.float32)

    @pl.when(k == pl.num_programs(1) - 1)
    def _finalize():
        res = acc_ref[...]
        inv = pl.reciprocal(res[:, 0:1], approx=False)
        out_ref[...] = (res * inv).astype(out_ref.dtype)


# ---------------------------------------------------------------------------
# pallas_call wrappers
# ---------------------------------------------------------------------------
def _resident_xw_spec(n, c_p, single_buffer):
    if single_buffer:
        # Constant index_map -> fetched once; Buffered(1) keeps a single copy.
        return pl.BlockSpec((n, c_p), lambda i: (0, 0), pipeline_mode=pl.Buffered(1))
    return pl.BlockSpec((n, c_p), lambda i: (0, 0))


def _gcn_call_single(adj, xw_aug, n, c_p, tm):
    grid = (pl.cdiv(n, tm),)
    cost = pl.CostEstimate(
        flops=2 * n * n * c_p,
        transcendentals=0,
        bytes_accessed=4 * (n * n + n * c_p + n * c_p),
    )

    def run(single_buffer):
        return pl.pallas_call(
            _gcn_kernel_single,
            out_shape=jax.ShapeDtypeStruct((n, c_p), jnp.float32),
            grid_spec=pltpu.PrefetchScalarGridSpec(
                num_scalar_prefetch=0,
                grid=grid,
                in_specs=[
                    pl.BlockSpec((tm, n), lambda i: (i, 0)),   # adj row slab
                    _resident_xw_spec(n, c_p, single_buffer),  # resident RHS
                ],
                out_specs=pl.BlockSpec((tm, c_p), lambda i: (i, 0)),
            ),
            compiler_params=pltpu.CompilerParams(
                dimension_semantics=("parallel",),   # row blocks shard on v7x cores
                vmem_limit_bytes=_VMEM_LIMIT_BYTES,
            ),
            cost_estimate=cost,
        )(adj, xw_aug)

    try:
        return run(True)
    except Exception:  # pragma: no cover -- build without single-buffer support
        return run(False)


def _gcn_call_ktiled(adj, xw_aug, n, c_p, *, tm=512, tk=2048):
    n_pk = _round_up(n, tk)
    xw_p = jnp.pad(xw_aug, ((0, n_pk - n), (0, 0)))   # tiny pad; zero rows add 0
    grid = (pl.cdiv(n, tm), n_pk // tk)
    cost = pl.CostEstimate(
        flops=2 * n * n_pk * c_p,
        transcendentals=0,
        bytes_accessed=4 * (n * n + grid[0] * n_pk * c_p + n * c_p),
    )
    kernel = functools.partial(_gcn_kernel_ktiled, tk=tk, n=n)
    return pl.pallas_call(
        kernel,
        out_shape=jax.ShapeDtypeStruct((n, c_p), jnp.float32),
        grid_spec=pltpu.PrefetchScalarGridSpec(
            num_scalar_prefetch=0,
            grid=grid,
            in_specs=[
                pl.BlockSpec((tm, tk), lambda i, k: (i, k)),   # adj tile, unpadded
                pl.BlockSpec((tk, c_p), lambda i, k: (k, 0)),  # XW K-slice
            ],
            out_specs=pl.BlockSpec((tm, c_p), lambda i, k: (i, 0)),
            scratch_shapes=[pltpu.VMEM((tm, c_p), jnp.float32)],
        ),
        compiler_params=pltpu.CompilerParams(
            dimension_semantics=("parallel", "arbitrary"),
            vmem_limit_bytes=_VMEM_LIMIT_BYTES,
        ),
        cost_estimate=cost,
    )(adj, xw_p)


def gcn_forward(adj, X, W, *, tm=256):
    """out = ((adj / adj.sum(1, keepdims=True)) @ X) @ W, computed as D^-1 (A (X W))."""
    n = adj.shape[0]
    _, out_dim = W.shape
    if adj.dtype != jnp.float32:
        adj = adj.astype(jnp.float32)   # avoid touching the N^2 array when already f32

    # Tiny wrapper-side precompute: XW = X @ W (HIGHEST precision keeps the f32
    # tolerance), augmented with a leading ones column so rowsum(adj) falls out
    # of the kernel's single matmul, then lane-padded to a multiple of 128.
    hp = jax.lax.Precision.HIGHEST
    xw = jnp.dot(X.astype(jnp.float32), W.astype(jnp.float32), precision=hp)
    c_p = _round_up(out_dim + 1, 128)
    xw_aug = jnp.concatenate(
        [jnp.ones((n, 1), jnp.float32), xw,
         jnp.zeros((n, c_p - out_dim - 1), jnp.float32)],
        axis=1,
    )

    # Row tile: multiple of 8 sublanes; keep >= 2 row blocks when possible so
    # the "parallel" axis shards across both v7x TensorCores.
    tm = min(tm, _round_up(n, 8))
    if pl.cdiv(n, tm) < 2 and n >= 16:
        tm = _round_up(pl.cdiv(n, 2), 8)

    # Conservative VMEM estimate (assume every operand is double-buffered).
    single_shot_bytes = 4 * (2 * tm * n + 2 * n * c_p + 2 * tm * c_p)
    if single_shot_bytes <= _SINGLE_SHOT_BUDGET:
        out_padded = _gcn_call_single(adj, xw_aug, n, c_p, tm)
    else:
        out_padded = _gcn_call_ktiled(adj, xw_aug, n, c_p)

    # Column 0 holds rowsum/rowsum == 1; the real result lives in 1..out_dim.
    return out_padded[:, 1:1 + out_dim]


def gcn_reference(adj, X, W):
    # Follows the PyTorch ordering: normalize adj first, then two matmuls.
    hp = jax.lax.Precision.HIGHEST
    rowsum = jnp.sum(adj, axis=1, keepdims=True)
    return jnp.dot(jnp.dot(adj / rowsum, X, precision=hp), W, precision=hp)


if __name__ == "__main__":
    key = jax.random.PRNGKey(0)
    k_adj, k_x, k_w = jax.random.split(key, 3)

    # Small but tiling-meaningful shapes for the GCN forward.
    N, in_dim, out_dim = 512, 32, 16

    # adj entries in (0.1, 1.1): every rowsum strictly positive (same positivity
    # assumption the PyTorch module makes). X, W ~ torch.rand-style uniforms.
    adj = jax.random.uniform(k_adj, (N, N), dtype=jnp.float32) + 0.1
    X = jax.random.uniform(k_x, (N, in_dim), dtype=jnp.float32)
    W = jax.random.uniform(k_w, (in_dim, out_dim), dtype=jnp.float32)

    out = jax.block_until_ready(gcn_forward(adj, X, W))
    ref = gcn_reference(adj, X, W)

    assert out.shape == (N, out_dim)
    assert bool(jnp.all(jnp.isfinite(out))), "non-finite values in kernel output"
    assert jnp.allclose(out, ref, atol=1e-3, rtol=1e-3), "mismatch vs reference"

    print("KERNEL_OK")
</pallas_src>

<mosaic_0001>
module attributes {stable_mosaic.version = 11 : i64} {
  func.func @_gcn_kernel_single(%arg0: i32, %arg1: memref<256x512xf32, #tpu.memory_space<vmem>>, %arg2: memref<512x128xf32, #tpu.memory_space<vmem>>, %arg3: memref<256x128xf32, #tpu.memory_space<vmem>>) attributes {dimension_semantics = [#tpu.dimension_semantics<parallel>], iteration_bounds = array<i64: 2>, scalar_prefetch = 0 : i64, scratch_operands = 0 : i64, tpu.core_type = #tpu.core_type<tc>, window_params = [{transform_indices = @transform_0, window_bounds = array<i64: 256, 512>}, {pipeline_mode = #tpu.pipeline_mode<synchronous>, transform_indices = @transform_1, window_bounds = array<i64: 512, 128>}, {transform_indices = @transform_2, window_bounds = array<i64: 256, 128>}]} {
    %c0 = arith.constant 0 : index
    %c0_0 = arith.constant 0 : index
    %0 = vector.load %arg1[%c0, %c0_0] : memref<256x512xf32, #tpu.memory_space<vmem>>, vector<256x512xf32>
    %c0_1 = arith.constant 0 : index
    %c0_2 = arith.constant 0 : index
    %1 = vector.load %arg2[%c0_1, %c0_2] : memref<512x128xf32, #tpu.memory_space<vmem>>, vector<512x128xf32>
    %cst = arith.constant dense<0.000000e+00> : vector<256x128xf32>
    %2 = tpu.matmul %0, %1, %cst {dimension_numbers = #tpu.dot_dimension_numbers<[1], [0], [0], [1], [0, 0, 1, 1], [], []>} : vector<256x512xf32>, vector<512x128xf32>, vector<256x128xf32> -> vector<256x128xf32>
    %3 = vector.extract_strided_slice %2 {offsets = [0, 0], sizes = [256, 1], strides = [1, 1]} : vector<256x128xf32> to vector<256x1xf32>
    %4 = tpu.reciprocal %3 : vector<256x1xf32> -> vector<256x1xf32>
    %5 = vector.broadcast %4 : vector<256x1xf32> to vector<256x128xf32>
    %6 = arith.mulf %2, %5 : vector<256x128xf32>
    %c0_3 = arith.constant 0 : index
    %c0_4 = arith.constant 0 : index
    %7 = vector.load %arg3[%c0_3, %c0_4] : memref<256x128xf32, #tpu.memory_space<vmem>>, vector<256x128xf32>
    tpu.vector_store %arg3[%c0_3, %c0_4], %6 {strides = array<i32>} : memref<256x128xf32, #tpu.memory_space<vmem>>, vector<256x128xf32>,
    return
  }
  func.func @transform_0(%arg0: i32) -> (i32, i32) {
    %c0_i32 = arith.constant 0 : i32
    %c0_i32_0 = arith.constant 0 : i32
    return %arg0, %c0_i32 : i32, i32
  }
  func.func @transform_1(%arg0: i32) -> (i32, i32) {
    %c0_i32 = arith.constant 0 : i32
    %c0_i32_0 = arith.constant 0 : i32
    %c0_i32_1 = arith.constant 0 : i32
    return %c0_i32, %c0_i32_0 : i32, i32
  }
  func.func @transform_2(%arg0: i32) -> (i32, i32) {
    %c0_i32 = arith.constant 0 : i32
    %c0_i32_0 = arith.constant 0 : i32
    return %arg0, %c0_i32 : i32, i32
  }
}

module attributes {stable_mosaic.version = 11 : i64} {
  func.func @_gcn_kernel_single(%arg0: i32, %arg1: memref<256x512xf32, #tpu.memory_space<vmem>>, %arg2: memref<512x128xf32, #tpu.memory_space<vmem>>, %arg3: memref<256x128xf32, #tpu.memory_space<vmem>>) attributes {dimension_semantics = [#tpu.dimension_semantics<parallel>], iteration_bounds = array<i64: 2>, scalar_prefetch = 0 : i64, scratch_operands = 0 : i64, tpu.core_type = #tpu.core_type<tc>, window_params = [{transform_indices = @transform_0, window_bounds = array<i64: 256, 512>}, {pipeline_mode = #tpu.pipeline_mode<synchronous>, transform_indices = @transform_1, window_bounds = array<i64: 512, 128>}, {transform_indices = @transform_2, window_bounds = array<i64: 256, 128>}]} {
    %c0 = arith.constant 0 : index
    %c0_0 = arith.constant 0 : index
    %0 = vector.load %arg1[%c0, %c0_0] : memref<256x512xf32, #tpu.memory_space<vmem>>, vector<256x512xf32>
    %c0_1 = arith.constant 0 : index
    %c0_2 = arith.constant 0 : index
    %1 = vector.load %arg2[%c0_1, %c0_2] : memref<512x128xf32, #tpu.memory_space<vmem>>, vector<512x128xf32>
    %cst = arith.constant dense<0.000000e+00> : vector<256x128xf32>
    %2 = tpu.matmul %0, %1, %cst {dimension_numbers = #tpu.dot_dimension_numbers<[1], [0], [0], [1], [0, 0, 1, 1], [], []>} : vector<256x512xf32>, vector<512x128xf32>, vector<256x128xf32> -> vector<256x128xf32>
    %3 = vector.extract_strided_slice %2 {offsets = [0, 0], sizes = [256, 1], strides = [1, 1]} : vector<256x128xf32> to vector<256x1xf32>
    %4 = tpu.reciprocal %3 : vector<256x1xf32> -> vector<256x1xf32>
    %5 = vector.broadcast %4 : vector<256x1xf32> to vector<256x128xf32>
    %6 = arith.mulf %2, %5 : vector<256x128xf32>
    %c0_3 = arith.constant 0 : index
    %c0_4 = arith.constant 0 : index
    %7 = vector.load %arg3[%c0_3, %c0_4] : memref<256x128xf32, #tpu.memory_space<vmem>>, vector<256x128xf32>
    tpu.vector_store %arg3[%c0_3, %c0_4], %6 {strides = array<i32>} : memref<256x128xf32, #tpu.memory_space<vmem>>, vector<256x128xf32>,
    return
  }
  func.func @transform_0(%arg0: i32) -> (i32, i32) {
    %c0_i32 = arith.constant 0 : i32
    %c0_i32_0 = arith.constant 0 : i32
    return %arg0, %c0_i32 : i32, i32
  }
  func.func @transform_1(%arg0: i32) -> (i32, i32) {
    %c0_i32 = arith.constant 0 : i32
    %c0_i32_0 = arith.constant 0 : i32
    %c0_i32_1 = arith.constant 0 : i32
    return %c0_i32, %c0_i32_0 : i32, i32
  }
  func.func @transform_2(%arg0: i32) -> (i32, i32) {
    %c0_i32 = arith.constant 0 : i32
    %c0_i32_0 = arith.constant 0 : i32
    return %arg0, %c0_i32 : i32, i32
  }
}

</mosaic_0001>

<llo_original>
// kernel: tpu_custom_call.1
$region0: #{tpu_custom_call.1}
  #allocation0 [shape = 'u32[]', space=smem, size = 0x4, offset = 0x4, fixed_abs, tag = 'smem constant byte address 0x4 - core index']
  #allocation1 [shape = 'u32[144,128]{1,0:T(1,128)}', space=vmem, size = 0x12000, scoped, tag = 'internal scratch']
  %s0 = inlined_call_operand.hbm [shape: f32[512,512], index: 0, kind: input, shape index: {}]
  %s1 = inlined_call_operand.hbm [shape: f32[512,128], index: 1, kind: input, shape index: {}]
  %s2 = inlined_call_operand.hbm [shape: f32[512,128], index: 2, kind: output, shape index: {}]
  %s3 = sld [smem:[#allocation0]]
  $region49: #{tpu_custom_call.1} parent=0
    _
  %s5 = ssub.s32 1, %s3
  %s6 = scalar_select 0, %s5, %s3
  $region1: #{tpu_custom_call.1} parent=0
    #allocation2 [shape = 'u8[1048576]{0}', space=vmem, size = 0x100000, scoped, tag = 'input window, operand 0']
    #allocation3 [shape = 's32[2]{0}', space=sflag, size = 0x8, scoped, tag = 'scoped memory for tpu_custom_call.1']
    #allocation4 [shape = 's32[2]{0}', space=sflag, size = 0x8, scoped, tag = 'scoped memory for tpu_custom_call.1']
    #allocation5 [shape = 'u8[262144]{0}', space=vmem, size = 0x40000, scoped, tag = 'input window, operand 1, single buffered']
    #allocation6 [shape = 's32[1]{0}', space=sflag, size = 0x4, scoped, tag = 'scoped memory for tpu_custom_call.1']
    #allocation7 [shape = 'u8[262144]{0}', space=vmem, size = 0x40000, scoped, tag = 'output window, operand 0']
    %7 = vsyncpa [#allocation3], 0
    %s8 = scalar_lea.sflag [#allocation3], 1
    %9 = vsyncpa %s8, 0
    %10 = vsyncpa [#allocation6], 0
    %11 = vsyncpa [#allocation4], 0
    %s12 = scalar_lea.sflag [#allocation4], 1
    %13 = vsyncpa %s12, 0
    loop: start=0, step=1, limit=4
    $region2: #{tpu_custom_call.1} parent=1 // loop_pre_header
      _
    $region3: #{tpu_custom_call.1} parent=1 // loop_header
      %s15 = sphi 0, %s19
      %p16 = scmp.ge.s32.totalorder %s15, 4
      %s25 = sphi 0, %s27
      %s28 = sphi 0, %s25
      %s29 = sphi 0, %s28
      %s45 = sphi 0, %s29
      %s49 = sphi 0, %s49
      %s51 = sphi 0, %s49
      %s52 = sphi 0, %s51
      %s66 = sphi 0, %s52
      %s72 = sphi 0, %s74
      %s75 = sphi 0, %s72
      %s76 = sphi 0, %s75
      %s92 = sphi 0, %s76
    $region4: #{tpu_custom_call.1} parent=1 // loop_header_branch
      %18 = sbr.rel (%p16) target = $region8
    $region5: #{tpu_custom_call.1} parent=1 // loop_body
      %s20 = ssub.s32 %s15, 1
      %s21 = ssub.s32 %s15, 2
      %s22 = sadd.s32 %s15, 1
      %s23 = ssub.s32 %s15, %s22
      %p24 = scmp.eq.s32.totalorder %s23, 0
      %s26 = sadd.s32 %s25, 1
      %s27 = scalar_select %p24, %s25, %s26
      %p30 = pneg %p24
      %p31 = scmp.eq.s32.totalorder %s15, 1
      %p32 = por %p30, %p31
      %p33 = scmp.ne.s32.totalorder %s25, %s28
      %p34 = scmp.eq.s32.totalorder %s15, 0
      %p35 = por %p33, %p34
      %p36 = scmp.ne.s32.totalorder %s25, %s28
      %p37 = scmp.eq.s32.totalorder %s20, 1
      %p38 = por %p36, %p37
      %p39 = scmp.ne.s32.totalorder %s28, %s29
      %p40 = scmp.eq.s32.totalorder %s20, 0
      %p41 = por %p39, %p40
      %p42 = scmp.ne.s32.totalorder %s28, %s29
      %p43 = scmp.eq.s32.totalorder %s21, 1
      %p44 = por %p42, %p43
      %p46 = scmp.ne.s32.totalorder %s29, %s45
      %p47 = scmp.eq.s32.totalorder %s21, 0
      %p48 = por %p46, %p47
      %s50 = sadd.s32 %s49, 1
      %p53 = scmp.eq.s32.totalorder %s15, 1
      %p54 = scmp.ne.s32.totalorder %s49, %s51
      %p55 = scmp.eq.s32.totalorder %s15, 0
      %p56 = por %p54, %p55
      %p57 = scmp.ne.s32.totalorder %s49, %s51
      %p58 = scmp.eq.s32.totalorder %s20, 1
      %p59 = por %p57, %p58
      %p60 = scmp.ne.s32.totalorder %s51, %s52
      %p61 = scmp.eq.s32.totalorder %s20, 0
      %p62 = por %p60, %p61
      %p63 = scmp.ne.s32.totalorder %s51, %s52
      %p64 = scmp.eq.s32.totalorder %s21, 1
      %p65 = por %p63, %p64
      %p67 = scmp.ne.s32.totalorder %s52, %s66
      %p68 = scmp.eq.s32.totalorder %s21, 0
      %p69 = por %p67, %p68
      %s70 = ssub.s32 %s15, %s22
      %p71 = scmp.eq.s32.totalorder %s70, 0
      %s73 = sadd.s32 %s72, 1
      %s74 = scalar_select %p71, %s72, %s73
      %p77 = pneg %p71
      %p78 = scmp.eq.s32.totalorder %s15, 1
      %p79 = por %p77, %p78
      %p80 = scmp.ne.s32.totalorder %s72, %s75
      %p81 = scmp.eq.s32.totalorder %s15, 0
      %p82 = por %p80, %p81
      %p83 = scmp.ne.s32.totalorder %s72, %s75
      %p84 = scmp.eq.s32.totalorder %s20, 1
      %p85 = por %p83, %p84
      %p86 = scmp.ne.s32.totalorder %s75, %s76
      %p87 = scmp.eq.s32.totalorder %s20, 0
      %p88 = por %p86, %p87
      %p89 = scmp.ne.s32.totalorder %s75, %s76
      %p90 = scmp.eq.s32.totalorder %s21, 1
      %p91 = por %p89, %p90
      %p93 = scmp.ne.s32.totalorder %s76, %s92
      %p94 = scmp.eq.s32.totalorder %s21, 0
      %p95 = por %p93, %p94
      %p96 = scmp.le.s32.totalorder 1, %s15
      %p97 = scmp.lt.s32.totalorder %s15, 3
      %p98 = pnand %p96, %p97
      %p99 = pneg %p98
      // Predicated region
      $region9: #{tpu_custom_call.1} parent=5 // pred_check
        _
      $region10: #{tpu_custom_call.1} parent=5 // pred_check_branch
        %101 = sbr.rel (%p98) target = $region12
      $region11: #{tpu_custom_call.1} parent=5 // pred_region
        %s102 = ssub.s32 %s15, 1
        // Predicated region
        $region13: #{tpu_custom_call.1} parent=11 // pred_check
          %p103 = pneg %p62
        $region14: #{tpu_custom_call.1} parent=11 // pred_check_branch
          %105 = sbr.rel (%p103) target = $region16
        $region15: #{tpu_custom_call.1} parent=11 // pred_region
          %s107 = ssub.s32 8192, 8192
          %108 = vsyncadd [#allocation6], %s107
          %s109 = sshll.u32 [#allocation5], 4
          %s110 = int_to_ptr.vmem [resolvable:$true] %s109
          %115 = dma.hbm_to_vmem [thread:$0]  %s1, 8192, %s110, [#allocation6], 128, 128, 8
        $region16: #{tpu_custom_call.1} parent=11 // pred_fallthru
          _
      $region12: #{tpu_custom_call.1} parent=5 // pred_fallthru
        _
      %p116 = scmp.lt.s32.totalorder %s15, 2
      // Predicated region
      $region17: #{tpu_custom_call.1} parent=5 // pred_check
        %p117 = pneg %p116
      $region18: #{tpu_custom_call.1} parent=5 // pred_check_branch
        %119 = sbr.rel (%p117) target = $region20
      $region19: #{tpu_custom_call.1} parent=5 // pred_region
        // Predicated region
        $region21: #{tpu_custom_call.1} parent=19 // pred_check
          %p120 = pneg %p35
        $region22: #{tpu_custom_call.1} parent=19 // pred_check_branch
          %122 = sbr.rel (%p120) target = $region24
        $region23: #{tpu_custom_call.1} parent=19 // pred_region
          %s123 = sand.u32 %s25, 1
          %s124 = scalar_lea.sflag [#allocation3], %s123
          %s125 = sand.u32 %s25, 1
          %s126 = smul.addr %s125, 1024
          %s127 = scalar_lea.vmem [#allocation2], %s126
          %s128 = smul.u32 32, %s15
          %s130 = ssub.s32 16384, 16384
          %131 = vsyncadd %s124, %s130
          %s132 = smul.addr %s128, 4
          %s133 = smul.addr %s132, 128
          %s134 = scalar_lea.hbm %s0, %s133
          %s135 = sshll.u32 %s127, 4
          %s136 = int_to_ptr.vmem [resolvable:$true] %s135
          %141 = dma.hbm_to_vmem [thread:$0]  %s134, 16384, %s136, %s124, 512, 512, 32
        $region24: #{tpu_custom_call.1} parent=19 // pred_fallthru
          _
      $region20: #{tpu_custom_call.1} parent=5 // pred_fallthru
        _
      %p142 = scmp.le.s32.totalorder 1, %s15
      %p143 = scmp.lt.s32.totalorder %s15, 3
      %p144 = pnand %p142, %p143
      %p145 = pneg %p144
      // Predicated region
      $region25: #{tpu_custom_call.1} parent=5 // pred_check
        _
      $region26: #{tpu_custom_call.1} parent=5 // pred_check_branch
        %147 = sbr.rel (%p144) target = $region28
      $region27: #{tpu_custom_call.1} parent=5 // pred_region
        %s148 = ssub.s32 %s15, 1
        %s149 = sand.u32 %s28, 1
        %s150 = scalar_lea.sflag [#allocation3], %s149
        %s151 = sand.u32 %s28, 1
        %s152 = smul.addr %s151, 1024
        %s153 = scalar_lea.vmem [#allocation2], %s152
        // Predicated region
        $region29: #{tpu_custom_call.1} parent=27 // pred_check
          %p154 = pneg %p41
        $region30: #{tpu_custom_call.1} parent=27 // pred_check_branch
          %156 = sbr.rel (%p154) target = $region32
        $region31: #{tpu_custom_call.1} parent=27 // pred_region
          %157 = dma.done %s150, 16384
        $region32: #{tpu_custom_call.1} parent=27 // pred_fallthru
          _
        // Predicated region
        $region33: #{tpu_custom_call.1} parent=27 // pred_check
          %p158 = pneg %p62
        $region34: #{tpu_custom_call.1} parent=27 // pred_check_branch
          %160 = sbr.rel (%p158) target = $region36
        $region35: #{tpu_custom_call.1} parent=27 // pred_region
          %161 = dma.done [#allocation6], 8192
        $region36: #{tpu_custom_call.1} parent=27 // pred_fallthru
          _
        %s162 = sand.u32 %s28, 1
        %s163 = scalar_lea.sflag [#allocation3], %s162
        %s164 = sand.u32 %s28, 1
        %s165 = smul.addr %s164, 1024
        %s166 = scalar_lea.vmem [#allocation2], %s165
        %p167 = pneg %p41
        %p168 = pneg %p38
        %p169 = pneg %p62
        %p170 = pneg %p59
        %p171 = pneg %p88
        %p172 = pneg %p85
        %s173 = sand.u32 %s75, 1
        %s174 = scalar_lea.sflag [#allocation4], %s173
        %s175 = sand.u32 %s75, 1
        %s176 = smul.addr %s175, 256
        %s177 = scalar_lea.vmem [#allocation7], %s176
        %s178 = smul.u32 32, %s20
        %s179 = smul.u32 32, %s20
        %v180 = vld [vmem:[%s153] sm:$0xff]
        %v181 = vld [vmem:[%s153 + $0x8] sm:$0xff]
        %v182 = vld [vmem:[%s153 + $0x10] sm:$0xff]
        %v183 = vld [vmem:[%s153 + $0x18] sm:$0xff]
        %v184 = vld [vmem:[%s153 + $0x20] sm:$0xff]
        %v185 = vld [vmem:[%s153 + $0x28] sm:$0xff]
        %v186 = vld [vmem:[%s153 + $0x30] sm:$0xff]
        %v187 = vld [vmem:[%s153 + $0x38] sm:$0xff]
        %v188 = vld [vmem:[%s153 + $0x40] sm:$0xff]
        %v189 = vld [vmem:[%s153 + $0x48] sm:$0xff]
        %v190 = vld [vmem:[%s153 + $0x50] sm:$0xff]
        %v191 = vld [vmem:[%s153 + $0x58] sm:$0xff]
        %v192 = vld [vmem:[%s153 + $0x60] sm:$0xff]
        %v193 = vld [vmem:[%s153 + $0x68] sm:$0xff]
        %v194 = vld [vmem:[%s153 + $0x70] sm:$0xff]
        %v195 = vld [vmem:[%s153 + $0x78] sm:$0xff]
        %v196 = vld [vmem:[%s153 + $0x80] sm:$0xff]
        %v197 = vld [vmem:[%s153 + $0x88] sm:$0xff]
        %v198 = vld [vmem:[%s153 + $0x90] sm:$0xff]
        %v199 = vld [vmem:[%s153 + $0x98] sm:$0xff]
        %v200 = vld [vmem:[%s153 + $0xa0] sm:$0xff]
        %v201 = vld [vmem:[%s153 + $0xa8] sm:$0xff]
        %v202 = vld [vmem:[%s153 + $0xb0] sm:$0xff]
        %v203 = vld [vmem:[%s153 + $0xb8] sm:$0xff]
        %v204 = vld [vmem:[%s153 + $0xc0] sm:$0xff]
        %v205 = vld [vmem:[%s153 + $0xc8] sm:$0xff]
        %v206 = vld [vmem:[%s153 + $0xd0] sm:$0xff]
        %v207 = vld [vmem:[%s153 + $0xd8] sm:$0xff]
        %v208 = vld [vmem:[%s153 + $0xe0] sm:$0xff]
        %v209 = vld [vmem:[%s153 + $0xe8] sm:$0xff]
        %v210 = vld [vmem:[%s153 + $0xf0] sm:$0xff]
        %v211 = vld [vmem:[%s153 + $0xf8] sm:$0xff]
        %v212 = vld [vmem:[%s153 + $0x100] sm:$0xff]
        %v213 = vld [vmem:[%s153 + $0x108] sm:$0xff]
        %v214 = vld [vmem:[%s153 + $0x110] sm:$0xff]
        %v215 = vld [vmem:[%s153 + $0x118] sm:$0xff]
        %v216 = vld [vmem:[%s153 + $0x120] sm:$0xff]
        %v217 = vld [vmem:[%s153 + $0x128] sm:$0xff]
        %v218 = vld [vmem:[%s153 + $0x130] sm:$0xff]
        %v219 = vld [vmem:[%s153 + $0x138] sm:$0xff]
        %v220 = vld [vmem:[%s153 + $0x140] sm:$0xff]
        %v221 = vld [vmem:[%s153 + $0x148] sm:$0xff]
        %v222 = vld [vmem:[%s153 + $0x150] sm:$0xff]
        %v223 = vld [vmem:[%s153 + $0x158] sm:$0xff]
        %v224 = vld [vmem:[%s153 + $0x160] sm:$0xff]
        %v225 = vld [vmem:[%s153 + $0x168] sm:$0xff]
        %v226 = vld [vmem:[%s153 + $0x170] sm:$0xff]
        %v227 = vld [vmem:[%s153 + $0x178] sm:$0xff]
        %v228 = vld [vmem:[%s153 + $0x180] sm:$0xff]
        %v229 = vld [vmem:[%s153 + $0x188] sm:$0xff]
        %v230 = vld [vmem:[%s153 + $0x190] sm:$0xff]
        %v231 = vld [vmem:[%s153 + $0x198] sm:$0xff]
        %v232 = vld [vmem:[%s153 + $0x1a0] sm:$0xff]
        %v233 = vld [vmem:[%s153 + $0x1a8] sm:$0xff]
        %v234 = vld [vmem:[%s153 + $0x1b0] sm:$0xff]
        %v235 = vld [vmem:[%s153 + $0x1b8] sm:$0xff]
        %v236 = vld [vmem:[%s153 + $0x1c0] sm:$0xff]
        %v237 = vld [vmem:[%s153 + $0x1c8] sm:$0xff]
        %v238 = vld [vmem:[%s153 + $0x1d0] sm:$0xff]
        %v239 = vld [vmem:[%s153 + $0x1d8] sm:$0xff]
        %v240 = vld [vmem:[%s153 + $0x1e0] sm:$0xff]
        %v241 = vld [vmem:[%s153 + $0x1e8] sm:$0xff]
        %v242 = vld [vmem:[%s153 + $0x1f0] sm:$0xff]
        %v243 = vld [vmem:[%s153 + $0x1f8] sm:$0xff]
        %v244 = vld [vmem:[%s153 + $0x200] sm:$0xff]
        %v245 = vld [vmem:[%s153 + $0x208] sm:$0xff]
        %v246 = vld [vmem:[%s153 + $0x210] sm:$0xff]
        %v247 = vld [vmem:[%s153 + $0x218] sm:$0xff]
        %v248 = vld [vmem:[%s153 + $0x220] sm:$0xff]
        %v249 = vld [vmem:[%s153 + $0x228] sm:$0xff]
        %v250 = vld [vmem:[%s153 + $0x230] sm:$0xff]
        %v251 = vld [vmem:[%s153 + $0x238] sm:$0xff]
        %v252 = vld [vmem:[%s153 + $0x240] sm:$0xff]
        %v253 = vld [vmem:[%s153 + $0x248] sm:$0xff]
        %v254 = vld [vmem:[%s153 + $0x250] sm:$0xff]
        %v255 = vld [vmem:[%s153 + $0x258] sm:$0xff]
        %v256 = vld [vmem:[%s153 + $0x260] sm:$0xff]
        %v257 = vld [vmem:[%s153 + $0x268] sm:$0xff]
        %v258 = vld [vmem:[%s153 + $0x270] sm:$0xff]
        %v259 = vld [vmem:[%s153 + $0x278] sm:$0xff]
        %v260 = vld [vmem:[%s153 + $0x280] sm:$0xff]
        %v261 = vld [vmem:[%s153 + $0x288] sm:$0xff]
        %v262 = vld [vmem:[%s153 + $0x290] sm:$0xff]
        %v263 = vld [vmem:[%s153 + $0x298] sm:$0xff]
        %v264 = vld [vmem:[%s153 + $0x2a0] sm:$0xff]
        %v265 = vld [vmem:[%s153 + $0x2a8] sm:$0xff]
        %v266 = vld [vmem:[%s153 + $0x2b0] sm:$0xff]
        %v267 = vld [vmem:[%s153 + $0x2b8] sm:$0xff]
        %v268 = vld [vmem:[%s153 + $0x2c0] sm:$0xff]
        %v269 = vld [vmem:[%s153 + $0x2c8] sm:$0xff]
        %v270 = vld [vmem:[%s153 + $0x2d0] sm:$0xff]
        %v271 = vld [vmem:[%s153 + $0x2d8] sm:$0xff]
        %v272 = vld [vmem:[%s153 + $0x2e0] sm:$0xff]
        %v273 = vld [vmem:[%s153 + $0x2e8] sm:$0xff]
        %v274 = vld [vmem:[%s153 + $0x2f0] sm:$0xff]
        %v275 = vld [vmem:[%s153 + $0x2f8] sm:$0xff]
        %v276 = vld [vmem:[%s153 + $0x300] sm:$0xff]
        %v277 = vld [vmem:[%s153 + $0x308] sm:$0xff]
        %v278 = vld [vmem:[%s153 + $0x310] sm:$0xff]
        %v279 = vld [vmem:[%s153 + $0x318] sm:$0xff]
        %v280 = vld [vmem:[%s153 + $0x320] sm:$0xff]
        %v281 = vld [vmem:[%s153 + $0x328] sm:$0xff]
        %v282 = vld [vmem:[%s153 + $0x330] sm:$0xff]
        %v283 = vld [vmem:[%s153 + $0x338] sm:$0xff]
        %v284 = vld [vmem:[%s153 + $0x340] sm:$0xff]
        %v285 = vld [vmem:[%s153 + $0x348] sm:$0xff]
        %v286 = vld [vmem:[%s153 + $0x350] sm:$0xff]
        %v287 = vld [vmem:[%s153 + $0x358] sm:$0xff]
        %v288 = vld [vmem:[%s153 + $0x360] sm:$0xff]
        %v289 = vld [vmem:[%s153 + $0x368] sm:$0xff]
        %v290 = vld [vmem:[%s153 + $0x370] sm:$0xff]
        %v291 = vld [vmem:[%s153 + $0x378] sm:$0xff]
        %v292 = vld [vmem:[%s153 + $0x380] sm:$0xff]
        %v293 = vld [vmem:[%s153 + $0x388] sm:$0xff]
        %v294 = vld [vmem:[%s153 + $0x390] sm:$0xff]
        %v295 = vld [vmem:[%s153 + $0x398] sm:$0xff]
        %v296 = vld [vmem:[%s153 + $0x3a0] sm:$0xff]
        %v297 = vld [vmem:[%s153 + $0x3a8] sm:$0xff]
        %v298 = vld [vmem:[%s153 + $0x3b0] sm:$0xff]
        %v299 = vld [vmem:[%s153 + $0x3b8] sm:$0xff]
        %v300 = vld [vmem:[%s153 + $0x3c0] sm:$0xff]
        %v301 = vld [vmem:[%s153 + $0x3c8] sm:$0xff]
        %v302 = vld [vmem:[%s153 + $0x3d0] sm:$0xff]
        %v303 = vld [vmem:[%s153 + $0x3d8] sm:$0xff]
        %v304 = vld [vmem:[%s153 + $0x3e0] sm:$0xff]
        %v305 = vld [vmem:[%s153 + $0x3e8] sm:$0xff]
        %v306 = vld [vmem:[%s153 + $0x3f0] sm:$0xff]
        %v307 = vld [vmem:[%s153 + $0x3f8] sm:$0xff]
        %v308 = vld [vmem:[#allocation5] sm:$0xff]
        %v309 = vld [vmem:[#allocation5 + $0x8] sm:$0xff]
        %v310 = vld [vmem:[#allocation5 + $0x10] sm:$0xff]
        %v311 = vld [vmem:[#allocation5 + $0x18] sm:$0xff]
        %v312 = vld [vmem:[#allocation5 + $0x20] sm:$0xff]
        %v313 = vld [vmem:[#allocation5 + $0x28] sm:$0xff]
        %v314 = vld [vmem:[#allocation5 + $0x30] sm:$0xff]
        %v315 = vld [vmem:[#allocation5 + $0x38] sm:$0xff]
        %v316 = vld [vmem:[#allocation5 + $0x40] sm:$0xff]
        %v317 = vld [vmem:[#allocation5 + $0x48] sm:$0xff]
        %v318 = vld [vmem:[#allocation5 + $0x50] sm:$0xff]
        %v319 = vld [vmem:[#allocation5 + $0x58] sm:$0xff]
        %v320 = vld [vmem:[#allocation5 + $0x60] sm:$0xff]
        %v321 = vld [vmem:[#allocation5 + $0x68] sm:$0xff]
        %v322 = vld [vmem:[#allocation5 + $0x70] sm:$0xff]
        %v323 = vld [vmem:[#allocation5 + $0x78] sm:$0xff]
        %v324 = vld [vmem:[#allocation5 + $0x80] sm:$0xff]
        %v325 = vld [vmem:[#allocation5 + $0x88] sm:$0xff]
        %v326 = vld [vmem:[#allocation5 + $0x90] sm:$0xff]
        %v327 = vld [vmem:[#allocation5 + $0x98] sm:$0xff]
        %v328 = vld [vmem:[#allocation5 + $0xa0] sm:$0xff]
        %v329 = vld [vmem:[#allocation5 + $0xa8] sm:$0xff]
        %v330 = vld [vmem:[#allocation5 + $0xb0] sm:$0xff]
        %v331 = vld [vmem:[#allocation5 + $0xb8] sm:$0xff]
        %v332 = vld [vmem:[#allocation5 + $0xc0] sm:$0xff]
        %v333 = vld [vmem:[#allocation5 + $0xc8] sm:$0xff]
        %v334 = vld [vmem:[#allocation5 + $0xd0] sm:$0xff]
        %v335 = vld [vmem:[#allocation5 + $0xd8] sm:$0xff]
        %v336 = vld [vmem:[#allocation5 + $0xe0] sm:$0xff]
        %v337 = vld [vmem:[#allocation5 + $0xe8] sm:$0xff]
        %v338 = vld [vmem:[#allocation5 + $0xf0] sm:$0xff]
        %v339 = vld [vmem:[#allocation5 + $0xf8] sm:$0xff]
        %v340 = vld [vmem:[#allocation5 + $0x100] sm:$0xff]
        %v341 = vld [vmem:[#allocation5 + $0x108] sm:$0xff]
        %v342 = vld [vmem:[#allocation5 + $0x110] sm:$0xff]
        %v343 = vld [vmem:[#allocation5 + $0x118] sm:$0xff]
        %v344 = vld [vmem:[#allocation5 + $0x120] sm:$0xff]
        %v345 = vld [vmem:[#allocation5 + $0x128] sm:$0xff]
        %v346 = vld [vmem:[#allocation5 + $0x130] sm:$0xff]
        %v347 = vld [vmem:[#allocation5 + $0x138] sm:$0xff]
        %v348 = vld [vmem:[#allocation5 + $0x140] sm:$0xff]
        %v349 = vld [vmem:[#allocation5 + $0x148] sm:$0xff]
        %v350 = vld [vmem:[#allocation5 + $0x150] sm:$0xff]
        %v351 = vld [vmem:[#allocation5 + $0x158] sm:$0xff]
        %v352 = vld [vmem:[#allocation5 + $0x160] sm:$0xff]
        %v353 = vld [vmem:[#allocation5 + $0x168] sm:$0xff]
        %v354 = vld [vmem:[#allocation5 + $0x170] sm:$0xff]
        %v355 = vld [vmem:[#allocation5 + $0x178] sm:$0xff]
        %v356 = vld [vmem:[#allocation5 + $0x180] sm:$0xff]
        %v357 = vld [vmem:[#allocation5 + $0x188] sm:$0xff]
        %v358 = vld [vmem:[#allocation5 + $0x190] sm:$0xff]
        %v359 = vld [vmem:[#allocation5 + $0x198] sm:$0xff]
        %v360 = vld [vmem:[#allocation5 + $0x1a0] sm:$0xff]
        %v361 = vld [vmem:[#allocation5 + $0x1a8] sm:$0xff]
        %v362 = vld [vmem:[#allocation5 + $0x1b0] sm:$0xff]
        %v363 = vld [vmem:[#allocation5 + $0x1b8] sm:$0xff]
        %v364 = vld [vmem:[#allocation5 + $0x1c0] sm:$0xff]
        %v365 = vld [vmem:[#allocation5 + $0x1c8] sm:$0xff]
        %v366 = vld [vmem:[#allocation5 + $0x1d0] sm:$0xff]
        %v367 = vld [vmem:[#allocation5 + $0x1d8] sm:$0xff]
        %v368 = vld [vmem:[#allocation5 + $0x1e0] sm:$0xff]
        %v369 = vld [vmem:[#allocation5 + $0x1e8] sm:$0xff]
        %v370 = vld [vmem:[#allocation5 + $0x1f0] sm:$0xff]
        %v371 = vld [vmem:[#allocation5 + $0x1f8] sm:$0xff]
        %372 = vmatprep.subr.mxu0 0.0
        %373 = vmatpush1.msra.mxu0 %v308
        %374 = vmatprep.subr.mxu0 0.0
        %375 = vmatpush1.msra.mxu0 %v309
        %376 = vmatprep.subr.mxu0 0.0
        %377 = vmatpush1.msra.mxu0 %v310
        %378 = vmatprep.subr.mxu0 0.0
        %379 = vmatpush1.msra.mxu0 %v311
        %380 = vmatprep.subr.mxu0 0.0
        %381 = vmatpush1.msra.mxu0 %v312
        %382 = vmatprep.subr.mxu0 0.0
        %383 = vmatpush1.msra.mxu0 %v313
        %384 = vmatprep.subr.mxu0 0.0
        %385 = vmatpush1.msra.mxu0 %v314
        %386 = vmatprep.subr.mxu0 0.0
        %387 = vmatpush1.msra.mxu0 %v315
        %388 = vmatprep.subr.mxu0 0.0
        %389 = vmatpush1.msra.mxu0 %v316
        %390 = vmatprep.subr.mxu0 0.0
        %391 = vmatpush1.msra.mxu0 %v317
        %392 = vmatprep.subr.mxu0 0.0
        %393 = vmatpush1.msra.mxu0 %v318
        %394 = vmatprep.subr.mxu0 0.0
        %395 = vmatpush1.msra.mxu0 %v319
        %396 = vmatprep.subr.mxu0 0.0
        %397 = vmatpush1.msra.mxu0 %v320
        %398 = vmatprep.subr.mxu0 0.0
        %399 = vmatpush1.msra.mxu0 %v321
        %400 = vmatprep.subr.mxu0 0.0
        %401 = vmatpush1.msra.mxu0 %v322
        %402 = vmatprep.subr.mxu0 0.0
        %403 = vmatpush1.msra.mxu0 %v323
        %404 = vmatprep.subr.mxu0 0.0
        %405 = vmatpush1.msra.mxu0 %v324
        %406 = vmatprep.subr.mxu0 0.0
        %407 = vmatpush1.msra.mxu0 %v325
        %408 = vmatprep.subr.mxu0 0.0
        %409 = vmatpush1.msra.mxu0 %v326
        %410 = vmatprep.subr.mxu0 0.0
        %411 = vmatpush1.msra.mxu0 %v327
        %412 = vmatprep.subr.mxu0 0.0
        %413 = vmatpush1.msra.mxu0 %v328
        %414 = vmatprep.subr.mxu0 0.0
        %415 = vmatpush1.msra.mxu0 %v329
        %416 = vmatprep.subr.mxu0 0.0
        %417 = vmatpush1.msra.mxu0 %v330
        %418 = vmatprep.subr.mxu0 0.0
        %419 = vmatpush1.msra.mxu0 %v331
        %420 = vmatprep.subr.mxu0 0.0
        %421 = vmatpush1.msra.mxu0 %v332
        %422 = vmatprep.subr.mxu0 0.0
        %423 = vmatpush1.msra.mxu0 %v333
        %424 = vmatprep.subr.mxu0 0.0
        %425 = vmatpush1.msra.mxu0 %v334
        %426 = vmatprep.subr.mxu0 0.0
        %427 = vmatpush1.msra.mxu0 %v335
        %428 = vmatprep.subr.mxu0 0.0
        %429 = vmatpush1.msra.mxu0 %v336
        %430 = vmatprep.subr.mxu0 0.0
        %431 = vmatpush1.msra.mxu0 %v337
        %432 = vmatprep.subr.mxu0 0.0
        %433 = vmatpush1.msra.mxu0 %v338
        %434 = vmatprep.subr.mxu0 0.0
        %435 = vmatpush1.msra.mxu0 %v339
        %436 = vmatprep.mubr.f32.mxu0 %v181
        %437 = vmatmul.mubr.f32.gmra.mrb[0].mxu0 %v180
        %v438 = vpop.f32.mrb[0].mxu0
        %v439 = vadd.f32 0.0, %v438
        %v440 = vpop.f32.mrb[0].mxu0
        %441 = vmatprep.mubr.f32.mxu0 %v185
        %442 = vmatmul.mubr.f32.gmra.mrb[0].mxu0 %v184
        %v443 = vpop.f32.mrb[0].mxu0
        %v444 = vadd.f32 0.0, %v443
        %v445 = vpop.f32.mrb[0].mxu0
        %446 = vmatprep.mubr.f32.mxu0 %v189
        %447 = vmatmul.mubr.f32.gmra.mrb[0].mxu0 %v188
        %v448 = vpop.f32.mrb[0].mxu0
        %v449 = vadd.f32 0.0, %v448
        %v450 = vpop.f32.mrb[0].mxu0
        %451 = vmatprep.mubr.f32.mxu0 %v193
        %452 = vmatmul.mubr.f32.gmra.mrb[0].mxu0 %v192
        %v453 = vpop.f32.mrb[0].mxu0
        %v454 = vadd.f32 0.0, %v453
        %v455 = vpop.f32.mrb[0].mxu0
        %456 = vmatprep.mubr.f32.mxu0 %v197
        %457 = vmatmul.mubr.f32.gmra.mrb[0].mxu0 %v196
        %v458 = vpop.f32.mrb[0].mxu0
        %v459 = vadd.f32 0.0, %v458
        %v460 = vpop.f32.mrb[0].mxu0
        %461 = vmatprep.mubr.f32.mxu0 %v201
        %462 = vmatmul.mubr.f32.gmra.mrb[0].mxu0 %v200
        %v463 = vpop.f32.mrb[0].mxu0
        %v464 = vadd.f32 0.0, %v463
        %v465 = vpop.f32.mrb[0].mxu0
        %466 = vmatprep.mubr.f32.mxu0 %v205
        %467 = vmatmul.mubr.f32.gmra.mrb[0].mxu0 %v204
        %v468 = vpop.f32.mrb[0].mxu0
        %v469 = vadd.f32 0.0, %v468
        %v470 = vpop.f32.mrb[0].mxu0
        %471 = vmatprep.mubr.f32.mxu0 %v209
        %472 = vmatmul.mubr.f32.gmra.mrb[0].mxu0 %v208
        %v473 = vpop.f32.mrb[0].mxu0
        %v474 = vadd.f32 0.0, %v473
        %v475 = vpop.f32.mrb[0].mxu0
        %476 = vmatprep.mubr.f32.mxu0 %v213
        %477 = vmatmul.mubr.f32.gmra.mrb[0].mxu0 %v212
        %v478 = vpop.f32.mrb[0].mxu0
        %v479 = vadd.f32 0.0, %v478
        %v480 = vpop.f32.mrb[0].mxu0
        %481 = vmatprep.mubr.f32.mxu0 %v217
        %482 = vmatmul.mubr.f32.gmra.mrb[0].mxu0 %v216
        %v483 = vpop.f32.mrb[0].mxu0
        %v484 = vadd.f32 0.0, %v483
        %v485 = vpop.f32.mrb[0].mxu0
        %486 = vmatprep.mubr.f32.mxu0 %v221
        %487 = vmatmul.mubr.f32.gmra.mrb[0].mxu0 %v220
        %v488 = vpop.f32.mrb[0].mxu0
        %v489 = vadd.f32 0.0, %v488
        %v490 = vpop.f32.mrb[0].mxu0
        %491 = vmatprep.mubr.f32.mxu0 %v225
        %492 = vmatmul.mubr.f32.gmra.mrb[0].mxu0 %v224
        %v493 = vpop.f32.mrb[0].mxu0
        %v494 = vadd.f32 0.0, %v493
        %v495 = vpop.f32.mrb[0].mxu0
        %496 = vmatprep.mubr.f32.mxu0 %v229
        %497 = vmatmul.mubr.f32.gmra.mrb[0].mxu0 %v228
        %v498 = vpop.f32.mrb[0].mxu0
        %v499 = vadd.f32 0.0, %v498
        %v500 = vpop.f32.mrb[0].mxu0
        %501 = vmatprep.mubr.f32.mxu0 %v233
        %502 = vmatmul.mubr.f32.gmra.mrb[0].mxu0 %v232
        %v503 = vpop.f32.mrb[0].mxu0
        %v504 = vadd.f32 0.0, %v503
        %v505 = vpop.f32.mrb[0].mxu0
        %506 = vmatprep.mubr.f32.mxu0 %v237
        %507 = vmatmul.mubr.f32.gmra.mrb[0].mxu0 %v236
        %v508 = vpop.f32.mrb[0].mxu0
        %v509 = vadd.f32 0.0, %v508
        %v510 = vpop.f32.mrb[0].mxu0
        %511 = vmatprep.mubr.f32.mxu0 %v241
        %512 = vmatmul.mubr.f32.gmra.mrb[0].mxu0 %v240
        %v513 = vpop.f32.mrb[0].mxu0
        %v514 = vadd.f32 0.0, %v513
        %v515 = vpop.f32.mrb[0].mxu0
        %516 = vmatprep.mubr.f32.mxu0 %v245
        %517 = vmatmul.mubr.f32.gmra.mrb[0].mxu0 %v244
        %v518 = vpop.f32.mrb[0].mxu0
        %v519 = vadd.f32 0.0, %v518
        %v520 = vpop.f32.mrb[0].mxu0
        %521 = vmatprep.mubr.f32.mxu0 %v249
        %522 = vmatmul.mubr.f32.gmra.mrb[0].mxu0 %v248
        %v523 = vpop.f32.mrb[0].mxu0
        %v524 = vadd.f32 0.0, %v523
        %v525 = vpop.f32.mrb[0].mxu0
        %526 = vmatprep.mubr.f32.mxu0 %v253
        %527 = vmatmul.mubr.f32.gmra.mrb[0].mxu0 %v252
        %v528 = vpop.f32.mrb[0].mxu0
        %v529 = vadd.f32 0.0, %v528
        %v530 = vpop.f32.mrb[0].mxu0
        %531 = vmatprep.mubr.f32.mxu0 %v257
        %532 = vmatmul.mubr.f32.gmra.mrb[0].mxu0 %v256
        %v533 = vpop.f32.mrb[0].mxu0
        %v534 = vadd.f32 0.0, %v533
        %v535 = vpop.f32.mrb[0].mxu0
        %536 = vmatprep.mubr.f32.mxu0 %v261
        %537 = vmatmul.mubr.f32.gmra.mrb[0].mxu0 %v260
        %v538 = vpop.f32.mrb[0].mxu0
        %v539 = vadd.f32 0.0, %v538
        %v540 = vpop.f32.mrb[0].mxu0
        %541 = vmatprep.mubr.f32.mxu0 %v265
        %542 = vmatmul.mubr.f32.gmra.mrb[0].mxu0 %v264
        %v543 = vpop.f32.mrb[0].mxu0
        %v544 = vadd.f32 0.0, %v543
        %v545 = vpop.f32.mrb[0].mxu0
        %546 = vmatprep.mubr.f32.mxu0 %v269
        %547 = vmatmul.mubr.f32.gmra.mrb[0].mxu0 %v268
        %v548 = vpop.f32.mrb[0].mxu0
        %v549 = vadd.f32 0.0, %v548
        %v550 = vpop.f32.mrb[0].mxu0
        %551 = vmatprep.mubr.f32.mxu0 %v273
        %552 = vmatmul.mubr.f32.gmra.mrb[0].mxu0 %v272
        %v553 = vpop.f32.mrb[0].mxu0
        %v554 = vadd.f32 0.0, %v553
        %v555 = vpop.f32.mrb[0].mxu0
        %556 = vmatprep.mubr.f32.mxu0 %v277
        %557 = vmatmul.mubr.f32.gmra.mrb[0].mxu0 %v276
        %v558 = vpop.f32.mrb[0].mxu0
        %v559 = vadd.f32 0.0, %v558
        %v560 = vpop.f32.mrb[0].mxu0
        %561 = vmatprep.mubr.f32.mxu0 %v281
        %562 = vmatmul.mubr.f32.gmra.mrb[0].mxu0 %v280
        %v563 = vpop.f32.mrb[0].mxu0
        %v564 = vadd.f32 0.0, %v563
        %v565 = vpop.f32.mrb[0].mxu0
        %566 = vmatprep.mubr.f32.mxu0 %v285
        %567 = vmatmul.mubr.f32.gmra.mrb[0].mxu0 %v284
        %v568 = vpop.f32.mrb[0].mxu0
        %v569 = vadd.f32 0.0, %v568
        %v570 = vpop.f32.mrb[0].mxu0
        %571 = vmatprep.mubr.f32.mxu0 %v289
        %572 = vmatmul.mubr.f32.gmra.mrb[0].mxu0 %v288
        %v573 = vpop.f32.mrb[0].mxu0
        %v574 = vadd.f32 0.0, %v573
        %v575 = vpop.f32.mrb[0].mxu0
        %576 = vmatprep.mubr.f32.mxu0 %v293
        %577 = vmatmul.mubr.f32.gmra.mrb[0].mxu0 %v292
        %v578 = vpop.f32.mrb[0].mxu0
        %v579 = vadd.f32 0.0, %v578
        %v580 = vpop.f32.mrb[0].mxu0
        %581 = vmatprep.mubr.f32.mxu0 %v297
        %582 = vmatmul.mubr.f32.gmra.mrb[0].mxu0 %v296
        %v583 = vpop.f32.mrb[0].mxu0
        %v584 = vadd.f32 0.0, %v583
        %v585 = vpop.f32.mrb[0].mxu0
        %586 = vmatprep.mubr.f32.mxu0 %v301
        %587 = vmatmul.mubr.f32.gmra.mrb[0].mxu0 %v300
        %v588 = vpop.f32.mrb[0].mxu0
        %v589 = vadd.f32 0.0, %v588
        %v590 = vpop.f32.mrb[0].mxu0
        %591 = vmatprep.mubr.f32.mxu0 %v305
        %592 = vmatmul.mubr.f32.gmra.mrb[0].mxu0 %v304
        %v593 = vpop.f32.mrb[0].mxu0
        %v594 = vadd.f32 0.0, %v593
        %v595 = vpop.f32.mrb[0].mxu0
        %596 = vdwg.mxu0
        %597 = vmatprep.subr.mxu0 0.0
        %598 = vmatpush1.msra.mxu0 %v340
        %599 = vmatprep.subr.mxu0 0.0
        %600 = vmatpush1.msra.mxu0 %v341
        %601 = vmatprep.subr.mxu0 0.0
        %602 = vmatpush1.msra.mxu0 %v342
        %603 = vmatprep.subr.mxu0 0.0
        %604 = vmatpush1.msra.mxu0 %v343
        %605 = vmatprep.subr.mxu0 0.0
        %606 = vmatpush1.msra.mxu0 %v344
        %607 = vmatprep.subr.mxu0 0.0
        %608 = vmatpush1.msra.mxu0 %v345
        %609 = vmatprep.subr.mxu0 0.0
        %610 = vmatpush1.msra.mxu0 %v346
        %611 = vmatprep.subr.mxu0 0.0
        %612 = vmatpush1.msra.mxu0 %v347
        %613 = vmatprep.subr.mxu0 0.0
        %614 = vmatpush1.msra.mxu0 %v348
        %615 = vmatprep.subr.mxu0 0.0
        %616 = vmatpush1.msra.mxu0 %v349
        %617 = vmatprep.subr.mxu0 0.0
        %618 = vmatpush1.msra.mxu0 %v350
        %619 = vmatprep.subr.mxu0 0.0
        %620 = vmatpush1.msra.mxu0 %v351
        %621 = vmatprep.subr.mxu0 0.0
        %622 = vmatpush1.msra.mxu0 %v352
        %623 = vmatprep.subr.mxu0 0.0
        %624 = vmatpush1.msra.mxu0 %v353
        %625 = vmatprep.subr.mxu0 0.0
        %626 = vmatpush1.msra.mxu0 %v354
        %627 = vmatprep.subr.mxu0 0.0
        %628 = vmatpush1.msra.mxu0 %v355
        %629 = vmatprep.subr.mxu0 0.0
        %630 = vmatpush1.msra.mxu0 %v356
        %631 = vmatprep.subr.mxu0 0.0
        %632 = vmatpush1.msra.mxu0 %v357
        %633 = vmatprep.subr.mxu0 0.0
        %634 = vmatpush1.msra.mxu0 %v358
        %635 = vmatprep.subr.mxu0 0.0
        %636 = vmatpush1.msra.mxu0 %v359
        %637 = vmatprep.subr.mxu0 0.0
        %638 = vmatpush1.msra.mxu0 %v360
        %639 = vmatprep.subr.mxu0 0.0
        %640 = vmatpush1.msra.mxu0 %v361
        %641 = vmatprep.subr.mxu0 0.0
        %642 = vmatpush1.msra.mxu0 %v362
        %643 = vmatprep.subr.mxu0 0.0
        %644 = vmatpush1.msra.mxu0 %v363
        %645 = vmatprep.subr.mxu0 0.0
        %646 = vmatpush1.msra.mxu0 %v364
        %647 = vmatprep.subr.mxu0 0.0
        %648 = vmatpush1.msra.mxu0 %v365
        %649 = vmatprep.subr.mxu0 0.0
        %650 = vmatpush1.msra.mxu0 %v366
        %651 = vmatprep.subr.mxu0 0.0
        %652 = vmatpush1.msra.mxu0 %v367
        %653 = vmatprep.subr.mxu0 0.0
        %654 = vmatpush1.msra.mxu0 %v368
        %655 = vmatprep.subr.mxu0 0.0
        %656 = vmatpush1.msra.mxu0 %v369
        %657 = vmatprep.subr.mxu0 0.0
        %658 = vmatpush1.msra.mxu0 %v370
        %659 = vmatprep.subr.mxu0 0.0
        %660 = vmatpush1.msra.mxu0 %v371
        %661 = vmatprep.mubr.f32.mxu0 %v183
        %662 = vmatmul.mubr.f32.gmra.mrb[0].mxu0 %v182
        %v663 = vpop.f32.mrb[0].mxu0
        %v664 = vadd.f32 %v439, %v663
        %v665 = vpop.f32.mrb[0].mxu0
        %666 = vmatprep.mubr.f32.mxu0 %v187
        %667 = vmatmul.mubr.f32.gmra.mrb[0].mxu0 %v186
        %v668 = vpop.f32.mrb[0].mxu0
        %v669 = vadd.f32 %v444, %v668
        %v670 = vpop.f32.mrb[0].mxu0
        %671 = vmatprep.mubr.f32.mxu0 %v191
        %672 = vmatmul.mubr.f32.gmra.mrb[0].mxu0 %v190
        %v673 = vpop.f32.mrb[0].mxu0
        %v674 = vadd.f32 %v449, %v673
        %v675 = vpop.f32.mrb[0].mxu0
        %676 = vmatprep.mubr.f32.mxu0 %v195
        %677 = vmatmul.mubr.f32.gmra.mrb[0].mxu0 %v194
        %v678 = vpop.f32.mrb[0].mxu0
        %v679 = vadd.f32 %v454, %v678
        %v680 = vpop.f32.mrb[0].mxu0
        %681 = vmatprep.mubr.f32.mxu0 %v199
        %682 = vmatmul.mubr.f32.gmra.mrb[0].mxu0 %v198
        %v683 = vpop.f32.mrb[0].mxu0
        %v684 = vadd.f32 %v459, %v683
        %v685 = vpop.f32.mrb[0].mxu0
        %686 = vmatprep.mubr.f32.mxu0 %v203
        %687 = vmatmul.mubr.f32.gmra.mrb[0].mxu0 %v202
        %v688 = vpop.f32.mrb[0].mxu0
        %v689 = vadd.f32 %v464, %v688
        %v690 = vpop.f32.mrb[0].mxu0
        %691 = vmatprep.mubr.f32.mxu0 %v207
        %692 = vmatmul.mubr.f32.gmra.mrb[0].mxu0 %v206
        %v693 = vpop.f32.mrb[0].mxu0
        %v694 = vadd.f32 %v469, %v693
        %v695 = vpop.f32.mrb[0].mxu0
        %696 = vmatprep.mubr.f32.mxu0 %v211
        %697 = vmatmul.mubr.f32.gmra.mrb[0].mxu0 %v210
        %v698 = vpop.f32.mrb[0].mxu0
        %v699 = vadd.f32 %v474, %v698
        %v700 = vpop.f32.mrb[0].mxu0
        %701 = vmatprep.mubr.f32.mxu0 %v215
        %702 = vmatmul.mubr.f32.gmra.mrb[0].mxu0 %v214
        %v703 = vpop.f32.mrb[0].mxu0
        %v704 = vadd.f32 %v479, %v703
        %v705 = vpop.f32.mrb[0].mxu0
        %706 = vmatprep.mubr.f32.mxu0 %v219
        %707 = vmatmul.mubr.f32.gmra.mrb[0].mxu0 %v218
        %v708 = vpop.f32.mrb[0].mxu0
        %v709 = vadd.f32 %v484, %v708
        %v710 = vpop.f32.mrb[0].mxu0
        %711 = vmatprep.mubr.f32.mxu0 %v223
        %712 = vmatmul.mubr.f32.gmra.mrb[0].mxu0 %v222
        %v713 = vpop.f32.mrb[0].mxu0
        %v714 = vadd.f32 %v489, %v713
        %v715 = vpop.f32.mrb[0].mxu0
        %716 = vmatprep.mubr.f32.mxu0 %v227
        %717 = vmatmul.mubr.f32.gmra.mrb[0].mxu0 %v226
        %v718 = vpop.f32.mrb[0].mxu0
        %v719 = vadd.f32 %v494, %v718
        %v720 = vpop.f32.mrb[0].mxu0
        %721 = vmatprep.mubr.f32.mxu0 %v231
        %722 = vmatmul.mubr.f32.gmra.mrb[0].mxu0 %v230
        %v723 = vpop.f32.mrb[0].mxu0
        %v724 = vadd.f32 %v499, %v723
        %v725 = vpop.f32.mrb[0].mxu0
        %726 = vmatprep.mubr.f32.mxu0 %v235
        %727 = vmatmul.mubr.f32.gmra.mrb[0].mxu0 %v234
        %v728 = vpop.f32.mrb[0].mxu0
        %v729 = vadd.f32 %v504, %v728
        %v730 = vpop.f32.mrb[0].mxu0
        %731 = vmatprep.mubr.f32.mxu0 %v239
        %732 = vmatmul.mubr.f32.gmra.mrb[0].mxu0 %v238
        %v733 = vpop.f32.mrb[0].mxu0
        %v734 = vadd.f32 %v509, %v733
        %v735 = vpop.f32.mrb[0].mxu0
        %736 = vmatprep.mubr.f32.mxu0 %v243
        %737 = vmatmul.mubr.f32.gmra.mrb[0].mxu0 %v242
        %v738 = vpop.f32.mrb[0].mxu0
        %v739 = vadd.f32 %v514, %v738
        %v740 = vpop.f32.mrb[0].mxu0
        %741 = vmatprep.mubr.f32.mxu0 %v247
        %742 = vmatmul.mubr.f32.gmra.mrb[0].mxu0 %v246
        %v743 = vpop.f32.mrb[0].mxu0
        %v744 = vadd.f32 %v519, %v743
        %v745 = vpop.f32.mrb[0].mxu0
        %746 = vmatprep.mubr.f32.mxu0 %v251
        %747 = vmatmul.mubr.f32.gmra.mrb[0].mxu0 %v250
        %v748 = vpop.f32.mrb[0].mxu0
        %v749 = vadd.f32 %v524, %v748
        %v750 = vpop.f32.mrb[0].mxu0
        %751 = vmatprep.mubr.f32.mxu0 %v255
        %752 = vmatmul.mubr.f32.gmra.mrb[0].mxu0 %v254
        %v753 = vpop.f32.mrb[0].mxu0
        %v754 = vadd.f32 %v529, %v753
        %v755 = vpop.f32.mrb[0].mxu0
        %756 = vmatprep.mubr.f32.mxu0 %v259
        %757 = vmatmul.mubr.f32.gmra.mrb[0].mxu0 %v258
        %v758 = vpop.f32.mrb[0].mxu0
        %v759 = vadd.f32 %v534, %v758
        %v760 = vpop.f32.mrb[0].mxu0
        %761 = vmatprep.mubr.f32.mxu0 %v263
        %762 = vmatmul.mubr.f32.gmra.mrb[0].mxu0 %v262
        %v763 = vpop.f32.mrb[0].mxu0
        %v764 = vadd.f32 %v539, %v763
        %v765 = vpop.f32.mrb[0].mxu0
        %766 = vmatprep.mubr.f32.mxu0 %v267
        %767 = vmatmul.mubr.f32.gmra.mrb[0].mxu0 %v266
        %v768 = vpop.f32.mrb[0].mxu0
        %v769 = vadd.f32 %v544, %v768
        %v770 = vpop.f32.mrb[0].mxu0
        %771 = vmatprep.mubr.f32.mxu0 %v271
        %772 = vmatmul.mubr.f32.gmra.mrb[0].mxu0 %v270
        %v773 = vpop.f32.mrb[0].mxu0
        %v774 = vadd.f32 %v549, %v773
        %v775 = vpop.f32.mrb[0].mxu0
        %776 = vmatprep.mubr.f32.mxu0 %v275
        %777 = vmatmul.mubr.f32.gmra.mrb[0].mxu0 %v274
        %v778 = vpop.f32.mrb[0].mxu0
        %v779 = vadd.f32 %v554, %v778
        %v780 = vpop.f32.mrb[0].mxu0
        %781 = vmatprep.mubr.f32.mxu0 %v279
        %782 = vmatmul.mubr.f32.gmra.mrb[0].mxu0 %v278
        %v783 = vpop.f32.mrb[0].mxu0
        %v784 = vadd.f32 %v559, %v783
        %v785 = vpop.f32.mrb[0].mxu0
        %786 = vmatprep.mubr.f32.mxu0 %v283
        %787 = vmatmul.mubr.f32.gmra.mrb[0].mxu0 %v282
        %v788 = vpop.f32.mrb[0].mxu0
        %v789 = vadd.f32 %v564, %v788
        %v790 = vpop.f32.mrb[0].mxu0
        %791 = vmatprep.mubr.f32.mxu0 %v287
        %792 = vmatmul.mubr.f32.gmra.mrb[0].mxu0 %v286
        %v793 = vpop.f32.mrb[0].mxu0
        %v794 = vadd.f32 %v569, %v793
        %v795 = vpop.f32.mrb[0].mxu0
        %796 = vmatprep.mubr.f32.mxu0 %v291
        %797 = vmatmul.mubr.f32.gmra.mrb[0].mxu0 %v290
        %v798 = vpop.f32.mrb[0].mxu0
        %v799 = vadd.f32 %v574, %v798
        %v800 = vpop.f32.mrb[0].mxu0
        %801 = vmatprep.mubr.f32.mxu0 %v295
        %802 = vmatmul.mubr.f32.gmra.mrb[0].mxu0 %v294
        %v803 = vpop.f32.mrb[0].mxu0
        %v804 = vadd.f32 %v579, %v803
        %v805 = vpop.f32.mrb[0].mxu0
        %806 = vmatprep.mubr.f32.mxu0 %v299
        %807 = vmatmul.mubr.f32.gmra.mrb[0].mxu0 %v298
        %v808 = vpop.f32.mrb[0].mxu0
        %v809 = vadd.f32 %v584, %v808
        %v810 = vpop.f32.mrb[0].mxu0
        %811 = vmatprep.mubr.f32.mxu0 %v303
        %812 = vmatmul.mubr.f32.gmra.mrb[0].mxu0 %v302
        %v813 = vpop.f32.mrb[0].mxu0
        %v814 = vadd.f32 %v589, %v813
        %v815 = vpop.f32.mrb[0].mxu0
        %816 = vmatprep.mubr.f32.mxu0 %v307
        %817 = vmatmul.mubr.f32.gmra.mrb[0].mxu0 %v306
        %v818 = vpop.f32.mrb[0].mxu0
        %v819 = vadd.f32 %v594, %v818
        %v820 = vpop.f32.mrb[0].mxu0
        %821 = vdwg.mxu0
        %v822 = vrcp.pop %v664
        %v823 = vrcp.pop %v669
        %v824 = vrcp.pop %v674
        %v825 = vrcp.pop %v679
        %v826 = vrcp.pop %v684
        %v827 = vrcp.pop %v689
        %v828 = vrcp.pop %v694
        %v829 = vrcp.pop %v699
        %v830 = vrcp.pop %v704
        %v831 = vrcp.pop %v709
        %v832 = vrcp.pop %v714
        %v833 = vrcp.pop %v719
        %v834 = vrcp.pop %v724
        %v835 = vrcp.pop %v729
        %v836 = vrcp.pop %v734
        %v837 = vrcp.pop %v739
        %v838 = vrcp.pop %v744
        %v839 = vrcp.pop %v749
        %v840 = vrcp.pop %v754
        %v841 = vrcp.pop %v759
        %v842 = vrcp.pop %v764
        %v843 = vrcp.pop %v769
        %v844 = vrcp.pop %v774
        %v845 = vrcp.pop %v779
        %v846 = vrcp.pop %v784
        %v847 = vrcp.pop %v789
        %v848 = vrcp.pop %v794
        %v849 = vrcp.pop %v799
        %v850 = vrcp.pop %v804
        %v851 = vrcp.pop %v809
        %v852 = vrcp.pop %v814
        %v853 = vrcp.pop %v819
        %855 = vset.pattern.permute.xlu0 0
        %856 = vperm.xlu0 %855, %v822
        %v857 = vpop.permute.xlu0 %856
        %860 = vset.pattern.permute.xlu0 0
        %861 = vperm.xlu0 %860, %v823
        %v862 = vpop.permute.xlu0 %861
        %865 = vset.pattern.permute.xlu0 0
        %866 = vperm.xlu0 %865, %v824
        %v867 = vpop.permute.xlu0 %866
        %870 = vset.pattern.permute.xlu0 0
        %871 = vperm.xlu0 %870, %v825
        %v872 = vpop.permute.xlu0 %871
        %875 = vset.pattern.permute.xlu0 0
        %876 = vperm.xlu0 %875, %v826
        %v877 = vpop.permute.xlu0 %876
        %880 = vset.pattern.permute.xlu0 0
        %881 = vperm.xlu0 %880, %v827
        %v882 = vpop.permute.xlu0 %881
        %885 = vset.pattern.permute.xlu0 0
        %886 = vperm.xlu0 %885, %v828
        %v887 = vpop.permute.xlu0 %886
        %890 = vset.pattern.permute.xlu0 0
        %891 = vperm.xlu0 %890, %v829
        %v892 = vpop.permute.xlu0 %891
        %895 = vset.pattern.permute.xlu0 0
        %896 = vperm.xlu0 %895, %v830
        %v897 = vpop.permute.xlu0 %896
        %900 = vset.pattern.permute.xlu0 0
        %901 = vperm.xlu0 %900, %v831
        %v902 = vpop.permute.xlu0 %901
        %905 = vset.pattern.permute.xlu0 0
        %906 = vperm.xlu0 %905, %v832
        %v907 = vpop.permute.xlu0 %906
        %910 = vset.pattern.permute.xlu0 0
        %911 = vperm.xlu0 %910, %v833
        %v912 = vpop.permute.xlu0 %911
        %915 = vset.pattern.permute.xlu0 0
        %916 = vperm.xlu0 %915, %v834
        %v917 = vpop.permute.xlu0 %916
        %920 = vset.pattern.permute.xlu0 0
        %921 = vperm.xlu0 %920, %v835
        %v922 = vpop.permute.xlu0 %921
        %925 = vset.pattern.permute.xlu0 0
        %926 = vperm.xlu0 %925, %v836
        %v927 = vpop.permute.xlu0 %926
        %930 = vset.pattern.permute.xlu0 0
        %931 = vperm.xlu0 %930, %v837
        %v932 = vpop.permute.xlu0 %931
        %935 = vset.pattern.permute.xlu0 0
        %936 = vperm.xlu0 %935, %v838
        %v937 = vpop.permute.xlu0 %936
        %940 = vset.pattern.permute.xlu0 0
        %941 = vperm.xlu0 %940, %v839
        %v942 = vpop.permute.xlu0 %941
        %945 = vset.pattern.permute.xlu0 0
        %946 = vperm.xlu0 %945, %v840
        %v947 = vpop.permute.xlu0 %946
        %950 = vset.pattern.permute.xlu0 0
        %951 = vperm.xlu0 %950, %v841
        %v952 = vpop.permute.xlu0 %951
        %955 = vset.pattern.permute.xlu0 0
        %956 = vperm.xlu0 %955, %v842
        %v957 = vpop.permute.xlu0 %956
        %960 = vset.pattern.permute.xlu0 0
        %961 = vperm.xlu0 %960, %v843
        %v962 = vpop.permute.xlu0 %961
        %965 = vset.pattern.permute.xlu0 0
        %966 = vperm.xlu0 %965, %v844
        %v967 = vpop.permute.xlu0 %966
        %970 = vset.pattern.permute.xlu0 0
        %971 = vperm.xlu0 %970, %v845
        %v972 = vpop.permute.xlu0 %971
        %975 = vset.pattern.permute.xlu0 0
        %976 = vperm.xlu0 %975, %v846
        %v977 = vpop.permute.xlu0 %976
        %980 = vset.pattern.permute.xlu0 0
        %981 = vperm.xlu0 %980, %v847
        %v982 = vpop.permute.xlu0 %981
        %985 = vset.pattern.permute.xlu0 0
        %986 = vperm.xlu0 %985, %v848
        %v987 = vpop.permute.xlu0 %986
        %990 = vset.pattern.permute.xlu0 0
        %991 = vperm.xlu0 %990, %v849
        %v992 = vpop.permute.xlu0 %991
        %995 = vset.pattern.permute.xlu0 0
        %996 = vperm.xlu0 %995, %v850
        %v997 = vpop.permute.xlu0 %996
        %1000 = vset.pattern.permute.xlu0 0
        %1001 = vperm.xlu0 %1000, %v851
        %v1002 = vpop.permute.xlu0 %1001
        %1005 = vset.pattern.permute.xlu0 0
        %1006 = vperm.xlu0 %1005, %v852
        %v1007 = vpop.permute.xlu0 %1006
        %1010 = vset.pattern.permute.xlu0 0
        %1011 = vperm.xlu0 %1010, %v853
        %v1012 = vpop.permute.xlu0 %1011
        %v1014 = vmul.f32 %v664, %v857
        %v1015 = vmul.f32 %v669, %v862
        %v1016 = vmul.f32 %v674, %v867
        %v1017 = vmul.f32 %v679, %v872
        %v1018 = vmul.f32 %v684, %v877
        %v1019 = vmul.f32 %v689, %v882
        %v1020 = vmul.f32 %v694, %v887
        %v1021 = vmul.f32 %v699, %v892
        %v1022 = vmul.f32 %v704, %v897
        %v1023 = vmul.f32 %v709, %v902
        %v1024 = vmul.f32 %v714, %v907
        %v1025 = vmul.f32 %v719, %v912
        %v1026 = vmul.f32 %v724, %v917
        %v1027 = vmul.f32 %v729, %v922
        %v1028 = vmul.f32 %v734, %v927
        %v1029 = vmul.f32 %v739, %v932
        %v1030 = vmul.f32 %v744, %v937
        %v1031 = vmul.f32 %v749, %v942
        %v1032 = vmul.f32 %v754, %v947
        %v1033 = vmul.f32 %v759, %v952
        %v1034 = vmul.f32 %v764, %v957
        %v1035 = vmul.f32 %v769, %v962
        %v1036 = vmul.f32 %v774, %v967
        %v1037 = vmul.f32 %v779, %v972
        %v1038 = vmul.f32 %v784, %v977
        %v1039 = vmul.f32 %v789, %v982
        %v1040 = vmul.f32 %v794, %v987
        %v1041 = vmul.f32 %v799, %v992
        %v1042 = vmul.f32 %v804, %v997
        %v1043 = vmul.f32 %v809, %v1002
        %v1044 = vmul.f32 %v814, %v1007
        %v1045 = vmul.f32 %v819, %v1012
        %1046 = vst [vmem:[%s177] sm:$0xff] %v1014
        %1047 = vst [vmem:[%s177 + $0x8] sm:$0xff] %v1015
        %1048 = vst [vmem:[%s177 + $0x10] sm:$0xff] %v1016
        %1049 = vst [vmem:[%s177 + $0x18] sm:$0xff] %v1017
        %1050 = vst [vmem:[%s177 + $0x20] sm:$0xff] %v1018
        %1051 = vst [vmem:[%s177 + $0x28] sm:$0xff] %v1019
        %1052 = vst [vmem:[%s177 + $0x30] sm:$0xff] %v1020
        %1053 = vst [vmem:[%s177 + $0x38] sm:$0xff] %v1021
        %1054 = vst [vmem:[%s177 + $0x40] sm:$0xff] %v1022
        %1055 = vst [vmem:[%s177 + $0x48] sm:$0xff] %v1023
        %1056 = vst [vmem:[%s177 + $0x50] sm:$0xff] %v1024
        %1057 = vst [vmem:[%s177 + $0x58] sm:$0xff] %v1025
        %1058 = vst [vmem:[%s177 + $0x60] sm:$0xff] %v1026
        %1059 = vst [vmem:[%s177 + $0x68] sm:$0xff] %v1027
        %1060 = vst [vmem:[%s177 + $0x70] sm:$0xff] %v1028
        %1061 = vst [vmem:[%s177 + $0x78] sm:$0xff] %v1029
        %1062 = vst [vmem:[%s177 + $0x80] sm:$0xff] %v1030
        %1063 = vst [vmem:[%s177 + $0x88] sm:$0xff] %v1031
        %1064 = vst [vmem:[%s177 + $0x90] sm:$0xff] %v1032
        %1065 = vst [vmem:[%s177 + $0x98] sm:$0xff] %v1033
        %1066 = vst [vmem:[%s177 + $0xa0] sm:$0xff] %v1034
        %1067 = vst [vmem:[%s177 + $0xa8] sm:$0xff] %v1035
        %1068 = vst [vmem:[%s177 + $0xb0] sm:$0xff] %v1036
        %1069 = vst [vmem:[%s177 + $0xb8] sm:$0xff] %v1037
        %1070 = vst [vmem:[%s177 + $0xc0] sm:$0xff] %v1038
        %1071 = vst [vmem:[%s177 + $0xc8] sm:$0xff] %v1039
        %1072 = vst [vmem:[%s177 + $0xd0] sm:$0xff] %v1040
        %1073 = vst [vmem:[%s177 + $0xd8] sm:$0xff] %v1041
        %1074 = vst [vmem:[%s177 + $0xe0] sm:$0xff] %v1042
        %1075 = vst [vmem:[%s177 + $0xe8] sm:$0xff] %v1043
        %1076 = vst [vmem:[%s177 + $0xf0] sm:$0xff] %v1044
        %1077 = vst [vmem:[%s177 + $0xf8] sm:$0xff] %v1045
        %s1078 = sand.u32 %s75, 1
        %s1079 = scalar_lea.sflag [#allocation4], %s1078
        %s1080 = sand.u32 %s75, 1
        %s1081 = smul.addr %s1080, 256
        %s1082 = scalar_lea.vmem [#allocation7], %s1081
        // Predicated region
        $region37: #{tpu_custom_call.1} parent=27 // pred_check
          %p1083 = pneg %p85
        $region38: #{tpu_custom_call.1} parent=27 // pred_check_branch
          %1085 = sbr.rel (%p1083) target = $region40
        $region39: #{tpu_custom_call.1} parent=27 // pred_region
          %s1086 = smul.u32 32, %s20
          %s1088 = ssub.s32 4096, 4096
          %1089 = vsyncadd %s1079, %s1088
          %s1090 = smul.addr %s1086, 128
          %s1091 = scalar_lea.hbm %s2, %s1090
          %s1092 = sshll.u32 %s1082, 4
          %s1093 = int_to_ptr.vmem [resolvable:$true] %s1092
          %1098 = dma.vmem_to_hbm [thread:$0]  %s1093, 4096, %s1091, %s1079, 128, 128, 8
        $region40: #{tpu_custom_call.1} parent=27 // pred_fallthru
          _
      $region28: #{tpu_custom_call.1} parent=5 // pred_fallthru
        _
      %p1099 = scmp.le.s32.totalorder 2, %s15
      // Predicated region
      $region41: #{tpu_custom_call.1} parent=5 // pred_check
        %p1100 = pneg %p1099
      $region42: #{tpu_custom_call.1} parent=5 // pred_check_branch
        %1102 = sbr.rel (%p1100) target = $region44
      $region43: #{tpu_custom_call.1} parent=5 // pred_region
        %s1103 = ssub.s32 %s15, 2
        // Predicated region
        $region45: #{tpu_custom_call.1} parent=43 // pred_check
          %p1104 = pneg %p91
        $region46: #{tpu_custom_call.1} parent=43 // pred_check_branch
          %1106 = sbr.rel (%p1104) target = $region48
        $region47: #{tpu_custom_call.1} parent=43 // pred_region
          %s1107 = sand.u32 %s76, 1
          %s1108 = scalar_lea.sflag [#allocation4], %s1107
          %s1109 = sand.u32 %s76, 1
          %s1110 = smul.addr %s1109, 256
          %s1111 = scalar_lea.vmem [#allocation7], %s1110
          %1112 = dma.done %s1108, 4096
        $region48: #{tpu_custom_call.1} parent=43 // pred_fallthru
          _
      $region44: #{tpu_custom_call.1} parent=5 // pred_fallthru
        _
    $region6: #{tpu_custom_call.1} parent=1 // loop_footer
      %s19 = sadd.s32 1, %s15
    $region7: #{tpu_custom_call.1} parent=1 // loop_footer_branch
      %14 = sbr.rel target = $region3
    $region8: #{tpu_custom_call.1} parent=1 // loop_exit
      _
    %1113 = vsyncpa [#allocation3], 1
    %s1114 = scalar_lea.sflag [#allocation3], 1
    %1115 = vsyncpa %s1114, 1
    %1116 = vsyncpa [#allocation6], 1
    %1117 = vsyncpa [#allocation4], 1
    %s1118 = scalar_lea.sflag [#allocation4], 1
    %1119 = vsyncpa %s1118, 1

// kernel: tpu_custom_call.1
$region0: #{tpu_custom_call.1}
  #allocation0 [shape = 'u32[]', space=smem, size = 0x4, offset = 0x4, fixed_abs, tag = 'smem constant byte address 0x4 - core index']
  #allocation1 [shape = 'u32[144,128]{1,0:T(1,128)}', space=vmem, size = 0x12000, scoped, tag = 'internal scratch']
  %s0 = inlined_call_operand.hbm [shape: f32[512,512], index: 0, kind: input, shape index: {}]
  %s1 = inlined_call_operand.hbm [shape: f32[512,128], index: 1, kind: input, shape index: {}]
  %s2 = inlined_call_operand.hbm [shape: f32[512,128], index: 2, kind: output, shape index: {}]
  %s3 = sld [smem:[#allocation0]]
  $region49: #{tpu_custom_call.1} parent=0
    _
  %s5 = ssub.s32 1, %s3
  %s6 = scalar_select 0, %s5, %s3
  $region1: #{tpu_custom_call.1} parent=0
    #allocation2 [shape = 'u8[1048576]{0}', space=vmem, size = 0x100000, scoped, tag = 'input window, operand 0']
    #allocation3 [shape = 's32[2]{0}', space=sflag, size = 0x8, scoped, tag = 'scoped memory for tpu_custom_call.1']
    #allocation4 [shape = 's32[2]{0}', space=sflag, size = 0x8, scoped, tag = 'scoped memory for tpu_custom_call.1']
    #allocation5 [shape = 'u8[262144]{0}', space=vmem, size = 0x40000, scoped, tag = 'input window, operand 1, single buffered']
    #allocation6 [shape = 's32[1]{0}', space=sflag, size = 0x4, scoped, tag = 'scoped memory for tpu_custom_call.1']
    #allocation7 [shape = 'u8[262144]{0}', space=vmem, size = 0x40000, scoped, tag = 'output window, operand 0']
    %7 = vsyncpa [#allocation3], 0
    %s8 = scalar_lea.sflag [#allocation3], 1
    %9 = vsyncpa %s8, 0
    %10 = vsyncpa [#allocation6], 0
    %11 = vsyncpa [#allocation4], 0
    %s12 = scalar_lea.sflag [#allocation4], 1
    %13 = vsyncpa %s12, 0
    loop: start=0, step=1, limit=4
    $region2: #{tpu_custom_call.1} parent=1 // loop_pre_header
      _
    $region3: #{tpu_custom_call.1} parent=1 // loop_header
      %s15 = sphi 0, %s19
      %p16 = scmp.ge.s32.totalorder %s15, 4
      %s25 = sphi 0, %s27
      %s28 = sphi 0, %s25
      %s29 = sphi 0, %s28
      %s45 = sphi 0, %s29
      %s49 = sphi 0, %s49
      %s51 = sphi 0, %s49
      %s52 = sphi 0, %s51
      %s66 = sphi 0, %s52
      %s72 = sphi 0, %s74
      %s75 = sphi 0, %s72
      %s76 = sphi 0, %s75
      %s92 = sphi 0, %s76
    $region4: #{tpu_custom_call.1} parent=1 // loop_header_branch
      %18 = sbr.rel (%p16) target = $region8
    $region5: #{tpu_custom_call.1} parent=1 // loop_body
      %s20 = ssub.s32 %s15, 1
      %s21 = ssub.s32 %s15, 2
      %s22 = sadd.s32 %s15, 1
      %s23 = ssub.s32 %s15, %s22
      %p24 = scmp.eq.s32.totalorder %s23, 0
      %s26 = sadd.s32 %s25, 1
      %s27 = scalar_select %p24, %s25, %s26
      %p30 = pneg %p24
      %p31 = scmp.eq.s32.totalorder %s15, 1
      %p32 = por %p30, %p31
      %p33 = scmp.ne.s32.totalorder %s25, %s28
      %p34 = scmp.eq.s32.totalorder %s15, 0
      %p35 = por %p33, %p34
      %p36 = scmp.ne.s32.totalorder %s25, %s28
      %p37 = scmp.eq.s32.totalorder %s20, 1
      %p38 = por %p36, %p37
      %p39 = scmp.ne.s32.totalorder %s28, %s29
      %p40 = scmp.eq.s32.totalorder %s20, 0
      %p41 = por %p39, %p40
      %p42 = scmp.ne.s32.totalorder %s28, %s29
      %p43 = scmp.eq.s32.totalorder %s21, 1
      %p44 = por %p42, %p43
      %p46 = scmp.ne.s32.totalorder %s29, %s45
      %p47 = scmp.eq.s32.totalorder %s21, 0
      %p48 = por %p46, %p47
      %s50 = sadd.s32 %s49, 1
      %p53 = scmp.eq.s32.totalorder %s15, 1
      %p54 = scmp.ne.s32.totalorder %s49, %s51
      %p55 = scmp.eq.s32.totalorder %s15, 0
      %p56 = por %p54, %p55
      %p57 = scmp.ne.s32.totalorder %s49, %s51
      %p58 = scmp.eq.s32.totalorder %s20, 1
      %p59 = por %p57, %p58
      %p60 = scmp.ne.s32.totalorder %s51, %s52
      %p61 = scmp.eq.s32.totalorder %s20, 0
      %p62 = por %p60, %p61
      %p63 = scmp.ne.s32.totalorder %s51, %s52
      %p64 = scmp.eq.s32.totalorder %s21, 1
      %p65 = por %p63, %p64
      %p67 = scmp.ne.s32.totalorder %s52, %s66
      %p68 = scmp.eq.s32.totalorder %s21, 0
      %p69 = por %p67, %p68
      %s70 = ssub.s32 %s15, %s22
      %p71 = scmp.eq.s32.totalorder %s70, 0
      %s73 = sadd.s32 %s72, 1
      %s74 = scalar_select %p71, %s72, %s73
      %p77 = pneg %p71
      %p78 = scmp.eq.s32.totalorder %s15, 1
      %p79 = por %p77, %p78
      %p80 = scmp.ne.s32.totalorder %s72, %s75
      %p81 = scmp.eq.s32.totalorder %s15, 0
      %p82 = por %p80, %p81
      %p83 = scmp.ne.s32.totalorder %s72, %s75
      %p84 = scmp.eq.s32.totalorder %s20, 1
      %p85 = por %p83, %p84
      %p86 = scmp.ne.s32.totalorder %s75, %s76
      %p87 = scmp.eq.s32.totalorder %s20, 0
      %p88 = por %p86, %p87
      %p89 = scmp.ne.s32.totalorder %s75, %s76
      %p90 = scmp.eq.s32.totalorder %s21, 1
      %p91 = por %p89, %p90
      %p93 = scmp.ne.s32.totalorder %s76, %s92
      %p94 = scmp.eq.s32.totalorder %s21, 0
      %p95 = por %p93, %p94
      %p96 = scmp.le.s32.totalorder 1, %s15
      %p97 = scmp.lt.s32.totalorder %s15, 3
      %p98 = pnand %p96, %p97
      %p99 = pneg %p98
      // Predicated region
      $region9: #{tpu_custom_call.1} parent=5 // pred_check
        _
      $region10: #{tpu_custom_call.1} parent=5 // pred_check_branch
        %101 = sbr.rel (%p98) target = $region12
      $region11: #{tpu_custom_call.1} parent=5 // pred_region
        %s102 = ssub.s32 %s15, 1
        // Predicated region
        $region13: #{tpu_custom_call.1} parent=11 // pred_check
          %p103 = pneg %p62
        $region14: #{tpu_custom_call.1} parent=11 // pred_check_branch
          %105 = sbr.rel (%p103) target = $region16
        $region15: #{tpu_custom_call.1} parent=11 // pred_region
          %s107 = ssub.s32 8192, 8192
          %108 = vsyncadd [#allocation6], %s107
          %s109 = sshll.u32 [#allocation5], 4
          %s110 = int_to_ptr.vmem [resolvable:$true] %s109
          %115 = dma.hbm_to_vmem [thread:$0]  %s1, 8192, %s110, [#allocation6], 128, 128, 8
        $region16: #{tpu_custom_call.1} parent=11 // pred_fallthru
          _
      $region12: #{tpu_custom_call.1} parent=5 // pred_fallthru
        _
      %p116 = scmp.lt.s32.totalorder %s15, 2
      // Predicated region
      $region17: #{tpu_custom_call.1} parent=5 // pred_check
        %p117 = pneg %p116
      $region18: #{tpu_custom_call.1} parent=5 // pred_check_branch
        %119 = sbr.rel (%p117) target = $region20
      $region19: #{tpu_custom_call.1} parent=5 // pred_region
        // Predicated region
        $region21: #{tpu_custom_call.1} parent=19 // pred_check
          %p120 = pneg %p35
        $region22: #{tpu_custom_call.1} parent=19 // pred_check_branch
          %122 = sbr.rel (%p120) target = $region24
        $region23: #{tpu_custom_call.1} parent=19 // pred_region
          %s123 = sand.u32 %s25, 1
          %s124 = scalar_lea.sflag [#allocation3], %s123
          %s125 = sand.u32 %s25, 1
          %s126 = smul.addr %s125, 1024
          %s127 = scalar_lea.vmem [#allocation2], %s126
          %s128 = smul.u32 32, %s15
          %s130 = ssub.s32 16384, 16384
          %131 = vsyncadd %s124, %s130
          %s132 = smul.addr %s128, 4
          %s133 = smul.addr %s132, 128
          %s134 = scalar_lea.hbm %s0, %s133
          %s135 = sshll.u32 %s127, 4
          %s136 = int_to_ptr.vmem [resolvable:$true] %s135
          %141 = dma.hbm_to_vmem [thread:$0]  %s134, 16384, %s136, %s124, 512, 512, 32
        $region24: #{tpu_custom_call.1} parent=19 // pred_fallthru
          _
      $region20: #{tpu_custom_call.1} parent=5 // pred_fallthru
        _
      %p142 = scmp.le.s32.totalorder 1, %s15
      %p143 = scmp.lt.s32.totalorder %s15, 3
      %p144 = pnand %p142, %p143
      %p145 = pneg %p144
      // Predicated region
      $region25: #{tpu_custom_call.1} parent=5 // pred_check
        _
      $region26: #{tpu_custom_call.1} parent=5 // pred_check_branch
        %147 = sbr.rel (%p144) target = $region28
      $region27: #{tpu_custom_call.1} parent=5 // pred_region
        %s148 = ssub.s32 %s15, 1
        %s149 = sand.u32 %s28, 1
        %s150 = scalar_lea.sflag [#allocation3], %s149
        %s151 = sand.u32 %s28, 1
        %s152 = smul.addr %s151, 1024
        %s153 = scalar_lea.vmem [#allocation2], %s152
        // Predicated region
        $region29: #{tpu_custom_call.1} parent=27 // pred_check
          %p154 = pneg %p41
        $region30: #{tpu_custom_call.1} parent=27 // pred_check_branch
          %156 = sbr.rel (%p154) target = $region32
        $region31: #{tpu_custom_call.1} parent=27 // pred_region
          %157 = dma.done %s150, 16384
        $region32: #{tpu_custom_call.1} parent=27 // pred_fallthru
          _
        // Predicated region
        $region33: #{tpu_custom_call.1} parent=27 // pred_check
          %p158 = pneg %p62
        $region34: #{tpu_custom_call.1} parent=27 // pred_check_branch
          %160 = sbr.rel (%p158) target = $region36
        $region35: #{tpu_custom_call.1} parent=27 // pred_region
          %161 = dma.done [#allocation6], 8192
        $region36: #{tpu_custom_call.1} parent=27 // pred_fallthru
          _
        %s162 = sand.u32 %s28, 1
        %s163 = scalar_lea.sflag [#allocation3], %s162
        %s164 = sand.u32 %s28, 1
        %s165 = smul.addr %s164, 1024
        %s166 = scalar_lea.vmem [#allocation2], %s165
        %p167 = pneg %p41
        %p168 = pneg %p38
        %p169 = pneg %p62
        %p170 = pneg %p59
        %p171 = pneg %p88
        %p172 = pneg %p85
        %s173 = sand.u32 %s75, 1
        %s174 = scalar_lea.sflag [#allocation4], %s173
        %s175 = sand.u32 %s75, 1
        %s176 = smul.addr %s175, 256
        %s177 = scalar_lea.vmem [#allocation7], %s176
        %s178 = smul.u32 32, %s20
        %s179 = smul.u32 32, %s20
        %v180 = vld [vmem:[%s153] sm:$0xff]
        %v181 = vld [vmem:[%s153 + $0x8] sm:$0xff]
        %v182 = vld [vmem:[%s153 + $0x10] sm:$0xff]
        %v183 = vld [vmem:[%s153 + $0x18] sm:$0xff]
        %v184 = vld [vmem:[%s153 + $0x20] sm:$0xff]
        %v185 = vld [vmem:[%s153 + $0x28] sm:$0xff]
        %v186 = vld [vmem:[%s153 + $0x30] sm:$0xff]
        %v187 = vld [vmem:[%s153 + $0x38] sm:$0xff]
        %v188 = vld [vmem:[%s153 + $0x40] sm:$0xff]
        %v189 = vld [vmem:[%s153 + $0x48] sm:$0xff]
        %v190 = vld [vmem:[%s153 + $0x50] sm:$0xff]
        %v191 = vld [vmem:[%s153 + $0x58] sm:$0xff]
        %v192 = vld [vmem:[%s153 + $0x60] sm:$0xff]
        %v193 = vld [vmem:[%s153 + $0x68] sm:$0xff]
        %v194 = vld [vmem:[%s153 + $0x70] sm:$0xff]
        %v195 = vld [vmem:[%s153 + $0x78] sm:$0xff]
        %v196 = vld [vmem:[%s153 + $0x80] sm:$0xff]
        %v197 = vld [vmem:[%s153 + $0x88] sm:$0xff]
        %v198 = vld [vmem:[%s153 + $0x90] sm:$0xff]
        %v199 = vld [vmem:[%s153 + $0x98] sm:$0xff]
        %v200 = vld [vmem:[%s153 + $0xa0] sm:$0xff]
        %v201 = vld [vmem:[%s153 + $0xa8] sm:$0xff]
        %v202 = vld [vmem:[%s153 + $0xb0] sm:$0xff]
        %v203 = vld [vmem:[%s153 + $0xb8] sm:$0xff]
        %v204 = vld [vmem:[%s153 + $0xc0] sm:$0xff]
        %v205 = vld [vmem:[%s153 + $0xc8] sm:$0xff]
        %v206 = vld [vmem:[%s153 + $0xd0] sm:$0xff]
        %v207 = vld [vmem:[%s153 + $0xd8] sm:$0xff]
        %v208 = vld [vmem:[%s153 + $0xe0] sm:$0xff]
        %v209 = vld [vmem:[%s153 + $0xe8] sm:$0xff]
        %v210 = vld [vmem:[%s153 + $0xf0] sm:$0xff]
        %v211 = vld [vmem:[%s153 + $0xf8] sm:$0xff]
        %v212 = vld [vmem:[%s153 + $0x100] sm:$0xff]
        %v213 = vld [vmem:[%s153 + $0x108] sm:$0xff]
        %v214 = vld [vmem:[%s153 + $0x110] sm:$0xff]
        %v215 = vld [vmem:[%s153 + $0x118] sm:$0xff]
        %v216 = vld [vmem:[%s153 + $0x120] sm:$0xff]
        %v217 = vld [vmem:[%s153 + $0x128] sm:$0xff]
        %v218 = vld [vmem:[%s153 + $0x130] sm:$0xff]
        %v219 = vld [vmem:[%s153 + $0x138] sm:$0xff]
        %v220 = vld [vmem:[%s153 + $0x140] sm:$0xff]
        %v221 = vld [vmem:[%s153 + $0x148] sm:$0xff]
        %v222 = vld [vmem:[%s153 + $0x150] sm:$0xff]
        %v223 = vld [vmem:[%s153 + $0x158] sm:$0xff]
        %v224 = vld [vmem:[%s153 + $0x160] sm:$0xff]
        %v225 = vld [vmem:[%s153 + $0x168] sm:$0xff]
        %v226 = vld [vmem:[%s153 + $0x170] sm:$0xff]
        %v227 = vld [vmem:[%s153 + $0x178] sm:$0xff]
        %v228 = vld [vmem:[%s153 + $0x180] sm:$0xff]
        %v229 = vld [vmem:[%s153 + $0x188] sm:$0xff]
        %v230 = vld [vmem:[%s153 + $0x190] sm:$0xff]
        %v231 = vld [vmem:[%s153 + $0x198] sm:$0xff]
        %v232 = vld [vmem:[%s153 + $0x1a0] sm:$0xff]
        %v233 = vld [vmem:[%s153 + $0x1a8] sm:$0xff]
        %v234 = vld [vmem:[%s153 + $0x1b0] sm:$0xff]
        %v235 = vld [vmem:[%s153 + $0x1b8] sm:$0xff]
        %v236 = vld [vmem:[%s153 + $0x1c0] sm:$0xff]
        %v237 = vld [vmem:[%s153 + $0x1c8] sm:$0xff]
        %v238 = vld [vmem:[%s153 + $0x1d0] sm:$0xff]
        %v239 = vld [vmem:[%s153 + $0x1d8] sm:$0xff]
        %v240 = vld [vmem:[%s153 + $0x1e0] sm:$0xff]
        %v241 = vld [vmem:[%s153 + $0x1e8] sm:$0xff]
        %v242 = vld [vmem:[%s153 + $0x1f0] sm:$0xff]
        %v243 = vld [vmem:[%s153 + $0x1f8] sm:$0xff]
        %v244 = vld [vmem:[%s153 + $0x200] sm:$0xff]
        %v245 = vld [vmem:[%s153 + $0x208] sm:$0xff]
        %v246 = vld [vmem:[%s153 + $0x210] sm:$0xff]
        %v247 = vld [vmem:[%s153 + $0x218] sm:$0xff]
        %v248 = vld [vmem:[%s153 + $0x220] sm:$0xff]
        %v249 = vld [vmem:[%s153 + $0x228] sm:$0xff]
        %v250 = vld [vmem:[%s153 + $0x230] sm:$0xff]
        %v251 = vld [vmem:[%s153 + $0x238] sm:$0xff]
        %v252 = vld [vmem:[%s153 + $0x240] sm:$0xff]
        %v253 = vld [vmem:[%s153 + $0x248] sm:$0xff]
        %v254 = vld [vmem:[%s153 + $0x250] sm:$0xff]
        %v255 = vld [vmem:[%s153 + $0x258] sm:$0xff]
        %v256 = vld [vmem:[%s153 + $0x260] sm:$0xff]
        %v257 = vld [vmem:[%s153 + $0x268] sm:$0xff]
        %v258 = vld [vmem:[%s153 + $0x270] sm:$0xff]
        %v259 = vld [vmem:[%s153 + $0x278] sm:$0xff]
        %v260 = vld [vmem:[%s153 + $0x280] sm:$0xff]
        %v261 = vld [vmem:[%s153 + $0x288] sm:$0xff]
        %v262 = vld [vmem:[%s153 + $0x290] sm:$0xff]
        %v263 = vld [vmem:[%s153 + $0x298] sm:$0xff]
        %v264 = vld [vmem:[%s153 + $0x2a0] sm:$0xff]
        %v265 = vld [vmem:[%s153 + $0x2a8] sm:$0xff]
        %v266 = vld [vmem:[%s153 + $0x2b0] sm:$0xff]
        %v267 = vld [vmem:[%s153 + $0x2b8] sm:$0xff]
        %v268 = vld [vmem:[%s153 + $0x2c0] sm:$0xff]
        %v269 = vld [vmem:[%s153 + $0x2c8] sm:$0xff]
        %v270 = vld [vmem:[%s153 + $0x2d0] sm:$0xff]
        %v271 = vld [vmem:[%s153 + $0x2d8] sm:$0xff]
        %v272 = vld [vmem:[%s153 + $0x2e0] sm:$0xff]
        %v273 = vld [vmem:[%s153 + $0x2e8] sm:$0xff]
        %v274 = vld [vmem:[%s153 + $0x2f0] sm:$0xff]
        %v275 = vld [vmem:[%s153 + $0x2f8] sm:$0xff]
        %v276 = vld [vmem:[%s153 + $0x300] sm:$0xff]
        %v277 = vld [vmem:[%s153 + $0x308] sm:$0xff]
        %v278 = vld [vmem:[%s153 + $0x310] sm:$0xff]
        %v279 = vld [vmem:[%s153 + $0x318] sm:$0xff]
        %v280 = vld [vmem:[%s153 + $0x320] sm:$0xff]
        %v281 = vld [vmem:[%s153 + $0x328] sm:$0xff]
        %v282 = vld [vmem:[%s153 + $0x330] sm:$0xff]
        %v283 = vld [vmem:[%s153 + $0x338] sm:$0xff]
        %v284 = vld [vmem:[%s153 + $0x340] sm:$0xff]
        %v285 = vld [vmem:[%s153 + $0x348] sm:$0xff]
        %v286 = vld [vmem:[%s153 + $0x350] sm:$0xff]
        %v287 = vld [vmem:[%s153 + $0x358] sm:$0xff]
        %v288 = vld [vmem:[%s153 + $0x360] sm:$0xff]
        %v289 = vld [vmem:[%s153 + $0x368] sm:$0xff]
        %v290 = vld [vmem:[%s153 + $0x370] sm:$0xff]
        %v291 = vld [vmem:[%s153 + $0x378] sm:$0xff]
        %v292 = vld [vmem:[%s153 + $0x380] sm:$0xff]
        %v293 = vld [vmem:[%s153 + $0x388] sm:$0xff]
        %v294 = vld [vmem:[%s153 + $0x390] sm:$0xff]
        %v295 = vld [vmem:[%s153 + $0x398] sm:$0xff]
        %v296 = vld [vmem:[%s153 + $0x3a0] sm:$0xff]
        %v297 = vld [vmem:[%s153 + $0x3a8] sm:$0xff]
        %v298 = vld [vmem:[%s153 + $0x3b0] sm:$0xff]
        %v299 = vld [vmem:[%s153 + $0x3b8] sm:$0xff]
        %v300 = vld [vmem:[%s153 + $0x3c0] sm:$0xff]
        %v301 = vld [vmem:[%s153 + $0x3c8] sm:$0xff]
        %v302 = vld [vmem:[%s153 + $0x3d0] sm:$0xff]
        %v303 = vld [vmem:[%s153 + $0x3d8] sm:$0xff]
        %v304 = vld [vmem:[%s153 + $0x3e0] sm:$0xff]
        %v305 = vld [vmem:[%s153 + $0x3e8] sm:$0xff]
        %v306 = vld [vmem:[%s153 + $0x3f0] sm:$0xff]
        %v307 = vld [vmem:[%s153 + $0x3f8] sm:$0xff]
        %v308 = vld [vmem:[#allocation5] sm:$0xff]
        %v309 = vld [vmem:[#allocation5 + $0x8] sm:$0xff]
        %v310 = vld [vmem:[#allocation5 + $0x10] sm:$0xff]
        %v311 = vld [vmem:[#allocation5 + $0x18] sm:$0xff]
        %v312 = vld [vmem:[#allocation5 + $0x20] sm:$0xff]
        %v313 = vld [vmem:[#allocation5 + $0x28] sm:$0xff]
        %v314 = vld [vmem:[#allocation5 + $0x30] sm:$0xff]
        %v315 = vld [vmem:[#allocation5 + $0x38] sm:$0xff]
        %v316 = vld [vmem:[#allocation5 + $0x40] sm:$0xff]
        %v317 = vld [vmem:[#allocation5 + $0x48] sm:$0xff]
        %v318 = vld [vmem:[#allocation5 + $0x50] sm:$0xff]
        %v319 = vld [vmem:[#allocation5 + $0x58] sm:$0xff]
        %v320 = vld [vmem:[#allocation5 + $0x60] sm:$0xff]
        %v321 = vld [vmem:[#allocation5 + $0x68] sm:$0xff]
        %v322 = vld [vmem:[#allocation5 + $0x70] sm:$0xff]
        %v323 = vld [vmem:[#allocation5 + $0x78] sm:$0xff]
        %v324 = vld [vmem:[#allocation5 + $0x80] sm:$0xff]
        %v325 = vld [vmem:[#allocation5 + $0x88] sm:$0xff]
        %v326 = vld [vmem:[#allocation5 + $0x90] sm:$0xff]
        %v327 = vld [vmem:[#allocation5 + $0x98] sm:$0xff]
        %v328 = vld [vmem:[#allocation5 + $0xa0] sm:$0xff]
        %v329 = vld [vmem:[#allocation5 + $0xa8] sm:$0xff]
        %v330 = vld [vmem:[#allocation5 + $0xb0] sm:$0xff]
        %v331 = vld [vmem:[#allocation5 + $0xb8] sm:$0xff]
        %v332 = vld [vmem:[#allocation5 + $0xc0] sm:$0xff]
        %v333 = vld [vmem:[#allocation5 + $0xc8] sm:$0xff]
        %v334 = vld [vmem:[#allocation5 + $0xd0] sm:$0xff]
        %v335 = vld [vmem:[#allocation5 + $0xd8] sm:$0xff]
        %v336 = vld [vmem:[#allocation5 + $0xe0] sm:$0xff]
        %v337 = vld [vmem:[#allocation5 + $0xe8] sm:$0xff]
        %v338 = vld [vmem:[#allocation5 + $0xf0] sm:$0xff]
        %v339 = vld [vmem:[#allocation5 + $0xf8] sm:$0xff]
        %v340 = vld [vmem:[#allocation5 + $0x100] sm:$0xff]
        %v341 = vld [vmem:[#allocation5 + $0x108] sm:$0xff]
        %v342 = vld [vmem:[#allocation5 + $0x110] sm:$0xff]
        %v343 = vld [vmem:[#allocation5 + $0x118] sm:$0xff]
        %v344 = vld [vmem:[#allocation5 + $0x120] sm:$0xff]
        %v345 = vld [vmem:[#allocation5 + $0x128] sm:$0xff]
        %v346 = vld [vmem:[#allocation5 + $0x130] sm:$0xff]
        %v347 = vld [vmem:[#allocation5 + $0x138] sm:$0xff]
        %v348 = vld [vmem:[#allocation5 + $0x140] sm:$0xff]
        %v349 = vld [vmem:[#allocation5 + $0x148] sm:$0xff]
        %v350 = vld [vmem:[#allocation5 + $0x150] sm:$0xff]
        %v351 = vld [vmem:[#allocation5 + $0x158] sm:$0xff]
        %v352 = vld [vmem:[#allocation5 + $0x160] sm:$0xff]
        %v353 = vld [vmem:[#allocation5 + $0x168] sm:$0xff]
        %v354 = vld [vmem:[#allocation5 + $0x170] sm:$0xff]
        %v355 = vld [vmem:[#allocation5 + $0x178] sm:$0xff]
        %v356 = vld [vmem:[#allocation5 + $0x180] sm:$0xff]
        %v357 = vld [vmem:[#allocation5 + $0x188] sm:$0xff]
        %v358 = vld [vmem:[#allocation5 + $0x190] sm:$0xff]
        %v359 = vld [vmem:[#allocation5 + $0x198] sm:$0xff]
        %v360 = vld [vmem:[#allocation5 + $0x1a0] sm:$0xff]
        %v361 = vld [vmem:[#allocation5 + $0x1a8] sm:$0xff]
        %v362 = vld [vmem:[#allocation5 + $0x1b0] sm:$0xff]
        %v363 = vld [vmem:[#allocation5 + $0x1b8] sm:$0xff]
        %v364 = vld [vmem:[#allocation5 + $0x1c0] sm:$0xff]
        %v365 = vld [vmem:[#allocation5 + $0x1c8] sm:$0xff]
        %v366 = vld [vmem:[#allocation5 + $0x1d0] sm:$0xff]
        %v367 = vld [vmem:[#allocation5 + $0x1d8] sm:$0xff]
        %v368 = vld [vmem:[#allocation5 + $0x1e0] sm:$0xff]
        %v369 = vld [vmem:[#allocation5 + $0x1e8] sm:$0xff]
        %v370 = vld [vmem:[#allocation5 + $0x1f0] sm:$0xff]
        %v371 = vld [vmem:[#allocation5 + $0x1f8] sm:$0xff]
        %372 = vmatprep.subr.mxu0 0.0
        %373 = vmatpush1.msra.mxu0 %v308
        %374 = vmatprep.subr.mxu0 0.0
        %375 = vmatpush1.msra.mxu0 %v309
        %376 = vmatprep.subr.mxu0 0.0
        %377 = vmatpush1.msra.mxu0 %v310
        %378 = vmatprep.subr.mxu0 0.0
        %379 = vmatpush1.msra.mxu0 %v311
        %380 = vmatprep.subr.mxu0 0.0
        %381 = vmatpush1.msra.mxu0 %v312
        %382 = vmatprep.subr.mxu0 0.0
        %383 = vmatpush1.msra.mxu0 %v313
        %384 = vmatprep.subr.mxu0 0.0
        %385 = vmatpush1.msra.mxu0 %v314
        %386 = vmatprep.subr.mxu0 0.0
        %387 = vmatpush1.msra.mxu0 %v315
        %388 = vmatprep.subr.mxu0 0.0
        %389 = vmatpush1.msra.mxu0 %v316
        %390 = vmatprep.subr.mxu0 0.0
        %391 = vmatpush1.msra.mxu0 %v317
        %392 = vmatprep.subr.mxu0 0.0
        %393 = vmatpush1.msra.mxu0 %v318
        %394 = vmatprep.subr.mxu0 0.0
        %395 = vmatpush1.msra.mxu0 %v319
        %396 = vmatprep.subr.mxu0 0.0
        %397 = vmatpush1.msra.mxu0 %v320
        %398 = vmatprep.subr.mxu0 0.0
        %399 = vmatpush1.msra.mxu0 %v321
        %400 = vmatprep.subr.mxu0 0.0
        %401 = vmatpush1.msra.mxu0 %v322
        %402 = vmatprep.subr.mxu0 0.0
        %403 = vmatpush1.msra.mxu0 %v323
        %404 = vmatprep.subr.mxu0 0.0
        %405 = vmatpush1.msra.mxu0 %v324
        %406 = vmatprep.subr.mxu0 0.0
        %407 = vmatpush1.msra.mxu0 %v325
        %408 = vmatprep.subr.mxu0 0.0
        %409 = vmatpush1.msra.mxu0 %v326
        %410 = vmatprep.subr.mxu0 0.0
        %411 = vmatpush1.msra.mxu0 %v327
        %412 = vmatprep.subr.mxu0 0.0
        %413 = vmatpush1.msra.mxu0 %v328
        %414 = vmatprep.subr.mxu0 0.0
        %415 = vmatpush1.msra.mxu0 %v329
        %416 = vmatprep.subr.mxu0 0.0
        %417 = vmatpush1.msra.mxu0 %v330
        %418 = vmatprep.subr.mxu0 0.0
        %419 = vmatpush1.msra.mxu0 %v331
        %420 = vmatprep.subr.mxu0 0.0
        %421 = vmatpush1.msra.mxu0 %v332
        %422 = vmatprep.subr.mxu0 0.0
        %423 = vmatpush1.msra.mxu0 %v333
        %424 = vmatprep.subr.mxu0 0.0
        %425 = vmatpush1.msra.mxu0 %v334
        %426 = vmatprep.subr.mxu0 0.0
        %427 = vmatpush1.msra.mxu0 %v335
        %428 = vmatprep.subr.mxu0 0.0
        %429 = vmatpush1.msra.mxu0 %v336
        %430 = vmatprep.subr.mxu0 0.0
        %431 = vmatpush1.msra.mxu0 %v337
        %432 = vmatprep.subr.mxu0 0.0
        %433 = vmatpush1.msra.mxu0 %v338
        %434 = vmatprep.subr.mxu0 0.0
        %435 = vmatpush1.msra.mxu0 %v339
        %436 = vmatprep.mubr.f32.mxu0 %v181
        %437 = vmatmul.mubr.f32.gmra.mrb[0].mxu0 %v180
        %v438 = vpop.f32.mrb[0].mxu0
        %v439 = vadd.f32 0.0, %v438
        %v440 = vpop.f32.mrb[0].mxu0
        %441 = vmatprep.mubr.f32.mxu0 %v185
        %442 = vmatmul.mubr.f32.gmra.mrb[0].mxu0 %v184
        %v443 = vpop.f32.mrb[0].mxu0
        %v444 = vadd.f32 0.0, %v443
        %v445 = vpop.f32.mrb[0].mxu0
        %446 = vmatprep.mubr.f32.mxu0 %v189
        %447 = vmatmul.mubr.f32.gmra.mrb[0].mxu0 %v188
        %v448 = vpop.f32.mrb[0].mxu0
        %v449 = vadd.f32 0.0, %v448
        %v450 = vpop.f32.mrb[0].mxu0
        %451 = vmatprep.mubr.f32.mxu0 %v193
        %452 = vmatmul.mubr.f32.gmra.mrb[0].mxu0 %v192
        %v453 = vpop.f32.mrb[0].mxu0
        %v454 = vadd.f32 0.0, %v453
        %v455 = vpop.f32.mrb[0].mxu0
        %456 = vmatprep.mubr.f32.mxu0 %v197
        %457 = vmatmul.mubr.f32.gmra.mrb[0].mxu0 %v196
        %v458 = vpop.f32.mrb[0].mxu0
        %v459 = vadd.f32 0.0, %v458
        %v460 = vpop.f32.mrb[0].mxu0
        %461 = vmatprep.mubr.f32.mxu0 %v201
        %462 = vmatmul.mubr.f32.gmra.mrb[0].mxu0 %v200
        %v463 = vpop.f32.mrb[0].mxu0
        %v464 = vadd.f32 0.0, %v463
        %v465 = vpop.f32.mrb[0].mxu0
        %466 = vmatprep.mubr.f32.mxu0 %v205
        %467 = vmatmul.mubr.f32.gmra.mrb[0].mxu0 %v204
        %v468 = vpop.f32.mrb[0].mxu0
        %v469 = vadd.f32 0.0, %v468
        %v470 = vpop.f32.mrb[0].mxu0
        %471 = vmatprep.mubr.f32.mxu0 %v209
        %472 = vmatmul.mubr.f32.gmra.mrb[0].mxu0 %v208
        %v473 = vpop.f32.mrb[0].mxu0
        %v474 = vadd.f32 0.0, %v473
        %v475 = vpop.f32.mrb[0].mxu0
        %476 = vmatprep.mubr.f32.mxu0 %v213
        %477 = vmatmul.mubr.f32.gmra.mrb[0].mxu0 %v212
        %v478 = vpop.f32.mrb[0].mxu0
        %v479 = vadd.f32 0.0, %v478
        %v480 = vpop.f32.mrb[0].mxu0
        %481 = vmatprep.mubr.f32.mxu0 %v217
        %482 = vmatmul.mubr.f32.gmra.mrb[0].mxu0 %v216
        %v483 = vpop.f32.mrb[0].mxu0
        %v484 = vadd.f32 0.0, %v483
        %v485 = vpop.f32.mrb[0].mxu0
        %486 = vmatprep.mubr.f32.mxu0 %v221
        %487 = vmatmul.mubr.f32.gmra.mrb[0].mxu0 %v220
        %v488 = vpop.f32.mrb[0].mxu0
        %v489 = vadd.f32 0.0, %v488
        %v490 = vpop.f32.mrb[0].mxu0
        %491 = vmatprep.mubr.f32.mxu0 %v225
        %492 = vmatmul.mubr.f32.gmra.mrb[0].mxu0 %v224
        %v493 = vpop.f32.mrb[0].mxu0
        %v494 = vadd.f32 0.0, %v493
        %v495 = vpop.f32.mrb[0].mxu0
        %496 = vmatprep.mubr.f32.mxu0 %v229
        %497 = vmatmul.mubr.f32.gmra.mrb[0].mxu0 %v228
        %v498 = vpop.f32.mrb[0].mxu0
        %v499 = vadd.f32 0.0, %v498
        %v500 = vpop.f32.mrb[0].mxu0
        %501 = vmatprep.mubr.f32.mxu0 %v233
        %502 = vmatmul.mubr.f32.gmra.mrb[0].mxu0 %v232
        %v503 = vpop.f32.mrb[0].mxu0
        %v504 = vadd.f32 0.0, %v503
        %v505 = vpop.f32.mrb[0].mxu0
        %506 = vmatprep.mubr.f32.mxu0 %v237
        %507 = vmatmul.mubr.f32.gmra.mrb[0].mxu0 %v236
        %v508 = vpop.f32.mrb[0].mxu0
        %v509 = vadd.f32 0.0, %v508
        %v510 = vpop.f32.mrb[0].mxu0
        %511 = vmatprep.mubr.f32.mxu0 %v241
        %512 = vmatmul.mubr.f32.gmra.mrb[0].mxu0 %v240
        %v513 = vpop.f32.mrb[0].mxu0
        %v514 = vadd.f32 0.0, %v513
        %v515 = vpop.f32.mrb[0].mxu0
        %516 = vmatprep.mubr.f32.mxu0 %v245
        %517 = vmatmul.mubr.f32.gmra.mrb[0].mxu0 %v244
        %v518 = vpop.f32.mrb[0].mxu0
        %v519 = vadd.f32 0.0, %v518
        %v520 = vpop.f32.mrb[0].mxu0
        %521 = vmatprep.mubr.f32.mxu0 %v249
        %522 = vmatmul.mubr.f32.gmra.mrb[0].mxu0 %v248
        %v523 = vpop.f32.mrb[0].mxu0
        %v524 = vadd.f32 0.0, %v523
        %v525 = vpop.f32.mrb[0].mxu0
        %526 = vmatprep.mubr.f32.mxu0 %v253
        %527 = vmatmul.mubr.f32.gmra.mrb[0].mxu0 %v252
        %v528 = vpop.f32.mrb[0].mxu0
        %v529 = vadd.f32 0.0, %v528
        %v530 = vpop.f32.mrb[0].mxu0
        %531 = vmatprep.mubr.f32.mxu0 %v257
        %532 = vmatmul.mubr.f32.gmra.mrb[0].mxu0 %v256
        %v533 = vpop.f32.mrb[0].mxu0
        %v534 = vadd.f32 0.0, %v533
        %v535 = vpop.f32.mrb[0].mxu0
        %536 = vmatprep.mubr.f32.mxu0 %v261
        %537 = vmatmul.mubr.f32.gmra.mrb[0].mxu0 %v260
        %v538 = vpop.f32.mrb[0].mxu0
        %v539 = vadd.f32 0.0, %v538
        %v540 = vpop.f32.mrb[0].mxu0
        %541 = vmatprep.mubr.f32.mxu0 %v265
        %542 = vmatmul.mubr.f32.gmra.mrb[0].mxu0 %v264
        %v543 = vpop.f32.mrb[0].mxu0
        %v544 = vadd.f32 0.0, %v543
        %v545 = vpop.f32.mrb[0].mxu0
        %546 = vmatprep.mubr.f32.mxu0 %v269
        %547 = vmatmul.mubr.f32.gmra.mrb[0].mxu0 %v268
        %v548 = vpop.f32.mrb[0].mxu0
        %v549 = vadd.f32 0.0, %v548
        %v550 = vpop.f32.mrb[0].mxu0
        %551 = vmatprep.mubr.f32.mxu0 %v273
        %552 = vmatmul.mubr.f32.gmra.mrb[0].mxu0 %v272
        %v553 = vpop.f32.mrb[0].mxu0
        %v554 = vadd.f32 0.0, %v553
        %v555 = vpop.f32.mrb[0].mxu0
        %556 = vmatprep.mubr.f32.mxu0 %v277
        %557 = vmatmul.mubr.f32.gmra.mrb[0].mxu0 %v276
        %v558 = vpop.f32.mrb[0].mxu0
        %v559 = vadd.f32 0.0, %v558
        %v560 = vpop.f32.mrb[0].mxu0
        %561 = vmatprep.mubr.f32.mxu0 %v281
        %562 = vmatmul.mubr.f32.gmra.mrb[0].mxu0 %v280
        %v563 = vpop.f32.mrb[0].mxu0
        %v564 = vadd.f32 0.0, %v563
        %v565 = vpop.f32.mrb[0].mxu0
        %566 = vmatprep.mubr.f32.mxu0 %v285
        %567 = vmatmul.mubr.f32.gmra.mrb[0].mxu0 %v284
        %v568 = vpop.f32.mrb[0].mxu0
        %v569 = vadd.f32 0.0, %v568
        %v570 = vpop.f32.mrb[0].mxu0
        %571 = vmatprep.mubr.f32.mxu0 %v289
        %572 = vmatmul.mubr.f32.gmra.mrb[0].mxu0 %v288
        %v573 = vpop.f32.mrb[0].mxu0
        %v574 = vadd.f32 0.0, %v573
        %v575 = vpop.f32.mrb[0].mxu0
        %576 = vmatprep.mubr.f32.mxu0 %v293
        %577 = vmatmul.mubr.f32.gmra.mrb[0].mxu0 %v292
        %v578 = vpop.f32.mrb[0].mxu0
        %v579 = vadd.f32 0.0, %v578
        %v580 = vpop.f32.mrb[0].mxu0
        %581 = vmatprep.mubr.f32.mxu0 %v297
        %582 = vmatmul.mubr.f32.gmra.mrb[0].mxu0 %v296
        %v583 = vpop.f32.mrb[0].mxu0
        %v584 = vadd.f32 0.0, %v583
        %v585 = vpop.f32.mrb[0].mxu0
        %586 = vmatprep.mubr.f32.mxu0 %v301
        %587 = vmatmul.mubr.f32.gmra.mrb[0].mxu0 %v300
        %v588 = vpop.f32.mrb[0].mxu0
        %v589 = vadd.f32 0.0, %v588
        %v590 = vpop.f32.mrb[0].mxu0
        %591 = vmatprep.mubr.f32.mxu0 %v305
        %592 = vmatmul.mubr.f32.gmra.mrb[0].mxu0 %v304
        %v593 = vpop.f32.mrb[0].mxu0
        %v594 = vadd.f32 0.0, %v593
        %v595 = vpop.f32.mrb[0].mxu0
        %596 = vdwg.mxu0
        %597 = vmatprep.subr.mxu0 0.0
        %598 = vmatpush1.msra.mxu0 %v340
        %599 = vmatprep.subr.mxu0 0.0
        %600 = vmatpush1.msra.mxu0 %v341
        %601 = vmatprep.subr.mxu0 0.0
        %602 = vmatpush1.msra.mxu0 %v342
        %603 = vmatprep.subr.mxu0 0.0
        %604 = vmatpush1.msra.mxu0 %v343
        %605 = vmatprep.subr.mxu0 0.0
        %606 = vmatpush1.msra.mxu0 %v344
        %607 = vmatprep.subr.mxu0 0.0
        %608 = vmatpush1.msra.mxu0 %v345
        %609 = vmatprep.subr.mxu0 0.0
        %610 = vmatpush1.msra.mxu0 %v346
        %611 = vmatprep.subr.mxu0 0.0
        %612 = vmatpush1.msra.mxu0 %v347
        %613 = vmatprep.subr.mxu0 0.0
        %614 = vmatpush1.msra.mxu0 %v348
        %615 = vmatprep.subr.mxu0 0.0
        %616 = vmatpush1.msra.mxu0 %v349
        %617 = vmatprep.subr.mxu0 0.0
        %618 = vmatpush1.msra.mxu0 %v350
        %619 = vmatprep.subr.mxu0 0.0
        %620 = vmatpush1.msra.mxu0 %v351
        %621 = vmatprep.subr.mxu0 0.0
        %622 = vmatpush1.msra.mxu0 %v352
        %623 = vmatprep.subr.mxu0 0.0
        %624 = vmatpush1.msra.mxu0 %v353
        %625 = vmatprep.subr.mxu0 0.0
        %626 = vmatpush1.msra.mxu0 %v354
        %627 = vmatprep.subr.mxu0 0.0
        %628 = vmatpush1.msra.mxu0 %v355
        %629 = vmatprep.subr.mxu0 0.0
        %630 = vmatpush1.msra.mxu0 %v356
        %631 = vmatprep.subr.mxu0 0.0
        %632 = vmatpush1.msra.mxu0 %v357
        %633 = vmatprep.subr.mxu0 0.0
        %634 = vmatpush1.msra.mxu0 %v358
        %635 = vmatprep.subr.mxu0 0.0
        %636 = vmatpush1.msra.mxu0 %v359
        %637 = vmatprep.subr.mxu0 0.0
        %638 = vmatpush1.msra.mxu0 %v360
        %639 = vmatprep.subr.mxu0 0.0
        %640 = vmatpush1.msra.mxu0 %v361
        %641 = vmatprep.subr.mxu0 0.0
        %642 = vmatpush1.msra.mxu0 %v362
        %643 = vmatprep.subr.mxu0 0.0
        %644 = vmatpush1.msra.mxu0 %v363
        %645 = vmatprep.subr.mxu0 0.0
        %646 = vmatpush1.msra.mxu0 %v364
        %647 = vmatprep.subr.mxu0 0.0
        %648 = vmatpush1.msra.mxu0 %v365
        %649 = vmatprep.subr.mxu0 0.0
        %650 = vmatpush1.msra.mxu0 %v366
        %651 = vmatprep.subr.mxu0 0.0
        %652 = vmatpush1.msra.mxu0 %v367
        %653 = vmatprep.subr.mxu0 0.0
        %654 = vmatpush1.msra.mxu0 %v368
        %655 = vmatprep.subr.mxu0 0.0
        %656 = vmatpush1.msra.mxu0 %v369
        %657 = vmatprep.subr.mxu0 0.0
        %658 = vmatpush1.msra.mxu0 %v370
        %659 = vmatprep.subr.mxu0 0.0
        %660 = vmatpush1.msra.mxu0 %v371
        %661 = vmatprep.mubr.f32.mxu0 %v183
        %662 = vmatmul.mubr.f32.gmra.mrb[0].mxu0 %v182
        %v663 = vpop.f32.mrb[0].mxu0
        %v664 = vadd.f32 %v439, %v663
        %v665 = vpop.f32.mrb[0].mxu0
        %666 = vmatprep.mubr.f32.mxu0 %v187
        %667 = vmatmul.mubr.f32.gmra.mrb[0].mxu0 %v186
        %v668 = vpop.f32.mrb[0].mxu0
        %v669 = vadd.f32 %v444, %v668
        %v670 = vpop.f32.mrb[0].mxu0
        %671 = vmatprep.mubr.f32.mxu0 %v191
        %672 = vmatmul.mubr.f32.gmra.mrb[0].mxu0 %v190
        %v673 = vpop.f32.mrb[0].mxu0
        %v674 = vadd.f32 %v449, %v673
        %v675 = vpop.f32.mrb[0].mxu0
        %676 = vmatprep.mubr.f32.mxu0 %v195
        %677 = vmatmul.mubr.f32.gmra.mrb[0].mxu0 %v194
        %v678 = vpop.f32.mrb[0].mxu0
        %v679 = vadd.f32 %v454, %v678
        %v680 = vpop.f32.mrb[0].mxu0
        %681 = vmatprep.mubr.f32.mxu0 %v199
        %682 = vmatmul.mubr.f32.gmra.mrb[0].mxu0 %v198
        %v683 = vpop.f32.mrb[0].mxu0
        %v684 = vadd.f32 %v459, %v683
        %v685 = vpop.f32.mrb[0].mxu0
        %686 = vmatprep.mubr.f32.mxu0 %v203
        %687 = vmatmul.mubr.f32.gmra.mrb[0].mxu0 %v202
        %v688 = vpop.f32.mrb[0].mxu0
        %v689 = vadd.f32 %v464, %v688
        %v690 = vpop.f32.mrb[0].mxu0
        %691 = vmatprep.mubr.f32.mxu0 %v207
        %692 = vmatmul.mubr.f32.gmra.mrb[0].mxu0 %v206
        %v693 = vpop.f32.mrb[0].mxu0
        %v694 = vadd.f32 %v469, %v693
        %v695 = vpop.f32.mrb[0].mxu0
        %696 = vmatprep.mubr.f32.mxu0 %v211
        %697 = vmatmul.mubr.f32.gmra.mrb[0].mxu0 %v210
        %v698 = vpop.f32.mrb[0].mxu0
        %v699 = vadd.f32 %v474, %v698
        %v700 = vpop.f32.mrb[0].mxu0
        %701 = vmatprep.mubr.f32.mxu0 %v215
        %702 = vmatmul.mubr.f32.gmra.mrb[0].mxu0 %v214
        %v703 = vpop.f32.mrb[0].mxu0
        %v704 = vadd.f32 %v479, %v703
        %v705 = vpop.f32.mrb[0].mxu0
        %706 = vmatprep.mubr.f32.mxu0 %v219
        %707 = vmatmul.mubr.f32.gmra.mrb[0].mxu0 %v218
        %v708 = vpop.f32.mrb[0].mxu0
        %v709 = vadd.f32 %v484, %v708
        %v710 = vpop.f32.mrb[0].mxu0
        %711 = vmatprep.mubr.f32.mxu0 %v223
        %712 = vmatmul.mubr.f32.gmra.mrb[0].mxu0 %v222
        %v713 = vpop.f32.mrb[0].mxu0
        %v714 = vadd.f32 %v489, %v713
        %v715 = vpop.f32.mrb[0].mxu0
        %716 = vmatprep.mubr.f32.mxu0 %v227
        %717 = vmatmul.mubr.f32.gmra.mrb[0].mxu0 %v226
        %v718 = vpop.f32.mrb[0].mxu0
        %v719 = vadd.f32 %v494, %v718
        %v720 = vpop.f32.mrb[0].mxu0
        %721 = vmatprep.mubr.f32.mxu0 %v231
        %722 = vmatmul.mubr.f32.gmra.mrb[0].mxu0 %v230
        %v723 = vpop.f32.mrb[0].mxu0
        %v724 = vadd.f32 %v499, %v723
        %v725 = vpop.f32.mrb[0].mxu0
        %726 = vmatprep.mubr.f32.mxu0 %v235
        %727 = vmatmul.mubr.f32.gmra.mrb[0].mxu0 %v234
        %v728 = vpop.f32.mrb[0].mxu0
        %v729 = vadd.f32 %v504, %v728
        %v730 = vpop.f32.mrb[0].mxu0
        %731 = vmatprep.mubr.f32.mxu0 %v239
        %732 = vmatmul.mubr.f32.gmra.mrb[0].mxu0 %v238
        %v733 = vpop.f32.mrb[0].mxu0
        %v734 = vadd.f32 %v509, %v733
        %v735 = vpop.f32.mrb[0].mxu0
        %736 = vmatprep.mubr.f32.mxu0 %v243
        %737 = vmatmul.mubr.f32.gmra.mrb[0].mxu0 %v242
        %v738 = vpop.f32.mrb[0].mxu0
        %v739 = vadd.f32 %v514, %v738
        %v740 = vpop.f32.mrb[0].mxu0
        %741 = vmatprep.mubr.f32.mxu0 %v247
        %742 = vmatmul.mubr.f32.gmra.mrb[0].mxu0 %v246
        %v743 = vpop.f32.mrb[0].mxu0
        %v744 = vadd.f32 %v519, %v743
        %v745 = vpop.f32.mrb[0].mxu0
        %746 = vmatprep.mubr.f32.mxu0 %v251
        %747 = vmatmul.mubr.f32.gmra.mrb[0].mxu0 %v250
        %v748 = vpop.f32.mrb[0].mxu0
        %v749 = vadd.f32 %v524, %v748
        %v750 = vpop.f32.mrb[0].mxu0
        %751 = vmatprep.mubr.f32.mxu0 %v255
        %752 = vmatmul.mubr.f32.gmra.mrb[0].mxu0 %v254
        %v753 = vpop.f32.mrb[0].mxu0
        %v754 = vadd.f32 %v529, %v753
        %v755 = vpop.f32.mrb[0].mxu0
        %756 = vmatprep.mubr.f32.mxu0 %v259
        %757 = vmatmul.mubr.f32.gmra.mrb[0].mxu0 %v258
        %v758 = vpop.f32.mrb[0].mxu0
        %v759 = vadd.f32 %v534, %v758
        %v760 = vpop.f32.mrb[0].mxu0
        %761 = vmatprep.mubr.f32.mxu0 %v263
        %762 = vmatmul.mubr.f32.gmra.mrb[0].mxu0 %v262
        %v763 = vpop.f32.mrb[0].mxu0
        %v764 = vadd.f32 %v539, %v763
        %v765 = vpop.f32.mrb[0].mxu0
        %766 = vmatprep.mubr.f32.mxu0 %v267
        %767 = vmatmul.mubr.f32.gmra.mrb[0].mxu0 %v266
        %v768 = vpop.f32.mrb[0].mxu0
        %v769 = vadd.f32 %v544, %v768
        %v770 = vpop.f32.mrb[0].mxu0
        %771 = vmatprep.mubr.f32.mxu0 %v271
        %772 = vmatmul.mubr.f32.gmra.mrb[0].mxu0 %v270
        %v773 = vpop.f32.mrb[0].mxu0
        %v774 = vadd.f32 %v549, %v773
        %v775 = vpop.f32.mrb[0].mxu0
        %776 = vmatprep.mubr.f32.mxu0 %v275
        %777 = vmatmul.mubr.f32.gmra.mrb[0].mxu0 %v274
        %v778 = vpop.f32.mrb[0].mxu0
        %v779 = vadd.f32 %v554, %v778
        %v780 = vpop.f32.mrb[0].mxu0
        %781 = vmatprep.mubr.f32.mxu0 %v279
        %782 = vmatmul.mubr.f32.gmra.mrb[0].mxu0 %v278
        %v783 = vpop.f32.mrb[0].mxu0
        %v784 = vadd.f32 %v559, %v783
        %v785 = vpop.f32.mrb[0].mxu0
        %786 = vmatprep.mubr.f32.mxu0 %v283
        %787 = vmatmul.mubr.f32.gmra.mrb[0].mxu0 %v282
        %v788 = vpop.f32.mrb[0].mxu0
        %v789 = vadd.f32 %v564, %v788
        %v790 = vpop.f32.mrb[0].mxu0
        %791 = vmatprep.mubr.f32.mxu0 %v287
        %792 = vmatmul.mubr.f32.gmra.mrb[0].mxu0 %v286
        %v793 = vpop.f32.mrb[0].mxu0
        %v794 = vadd.f32 %v569, %v793
        %v795 = vpop.f32.mrb[0].mxu0
        %796 = vmatprep.mubr.f32.mxu0 %v291
        %797 = vmatmul.mubr.f32.gmra.mrb[0].mxu0 %v290
        %v798 = vpop.f32.mrb[0].mxu0
        %v799 = vadd.f32 %v574, %v798
        %v800 = vpop.f32.mrb[0].mxu0
        %801 = vmatprep.mubr.f32.mxu0 %v295
        %802 = vmatmul.mubr.f32.gmra.mrb[0].mxu0 %v294
        %v803 = vpop.f32.mrb[0].mxu0
        %v804 = vadd.f32 %v579, %v803
        %v805 = vpop.f32.mrb[0].mxu0
        %806 = vmatprep.mubr.f32.mxu0 %v299
        %807 = vmatmul.mubr.f32.gmra.mrb[0].mxu0 %v298
        %v808 = vpop.f32.mrb[0].mxu0
        %v809 = vadd.f32 %v584, %v808
        %v810 = vpop.f32.mrb[0].mxu0
        %811 = vmatprep.mubr.f32.mxu0 %v303
        %812 = vmatmul.mubr.f32.gmra.mrb[0].mxu0 %v302
        %v813 = vpop.f32.mrb[0].mxu0
        %v814 = vadd.f32 %v589, %v813
        %v815 = vpop.f32.mrb[0].mxu0
        %816 = vmatprep.mubr.f32.mxu0 %v307
        %817 = vmatmul.mubr.f32.gmra.mrb[0].mxu0 %v306
        %v818 = vpop.f32.mrb[0].mxu0
        %v819 = vadd.f32 %v594, %v818
        %v820 = vpop.f32.mrb[0].mxu0
        %821 = vdwg.mxu0
        %v822 = vrcp.pop %v664
        %v823 = vrcp.pop %v669
        %v824 = vrcp.pop %v674
        %v825 = vrcp.pop %v679
        %v826 = vrcp.pop %v684
        %v827 = vrcp.pop %v689
        %v828 = vrcp.pop %v694
        %v829 = vrcp.pop %v699
        %v830 = vrcp.pop %v704
        %v831 = vrcp.pop %v709
        %v832 = vrcp.pop %v714
        %v833 = vrcp.pop %v719
        %v834 = vrcp.pop %v724
        %v835 = vrcp.pop %v729
        %v836 = vrcp.pop %v734
        %v837 = vrcp.pop %v739
        %v838 = vrcp.pop %v744
        %v839 = vrcp.pop %v749
        %v840 = vrcp.pop %v754
        %v841 = vrcp.pop %v759
        %v842 = vrcp.pop %v764
        %v843 = vrcp.pop %v769
        %v844 = vrcp.pop %v774
        %v845 = vrcp.pop %v779
        %v846 = vrcp.pop %v784
        %v847 = vrcp.pop %v789
        %v848 = vrcp.pop %v794
        %v849 = vrcp.pop %v799
        %v850 = vrcp.pop %v804
        %v851 = vrcp.pop %v809
        %v852 = vrcp.pop %v814
        %v853 = vrcp.pop %v819
        %855 = vset.pattern.permute.xlu0 0
        %856 = vperm.xlu0 %855, %v822
        %v857 = vpop.permute.xlu0 %856
        %860 = vset.pattern.permute.xlu0 0
        %861 = vperm.xlu0 %860, %v823
        %v862 = vpop.permute.xlu0 %861
        %865 = vset.pattern.permute.xlu0 0
        %866 = vperm.xlu0 %865, %v824
        %v867 = vpop.permute.xlu0 %866
        %870 = vset.pattern.permute.xlu0 0
        %871 = vperm.xlu0 %870, %v825
        %v872 = vpop.permute.xlu0 %871
        %875 = vset.pattern.permute.xlu0 0
        %876 = vperm.xlu0 %875, %v826
        %v877 = vpop.permute.xlu0 %876
        %880 = vset.pattern.permute.xlu0 0
        %881 = vperm.xlu0 %880, %v827
        %v882 = vpop.permute.xlu0 %881
        %885 = vset.pattern.permute.xlu0 0
        %886 = vperm.xlu0 %885, %v828
        %v887 = vpop.permute.xlu0 %886
        %890 = vset.pattern.permute.xlu0 0
        %891 = vperm.xlu0 %890, %v829
        %v892 = vpop.permute.xlu0 %891
        %895 = vset.pattern.permute.xlu0 0
        %896 = vperm.xlu0 %895, %v830
        %v897 = vpop.permute.xlu0 %896
        %900 = vset.pattern.permute.xlu0 0
        %901 = vperm.xlu0 %900, %v831
        %v902 = vpop.permute.xlu0 %901
        %905 = vset.pattern.permute.xlu0 0
        %906 = vperm.xlu0 %905, %v832
        %v907 = vpop.permute.xlu0 %906
        %910 = vset.pattern.permute.xlu0 0
        %911 = vperm.xlu0 %910, %v833
        %v912 = vpop.permute.xlu0 %911
        %915 = vset.pattern.permute.xlu0 0
        %916 = vperm.xlu0 %915, %v834
        %v917 = vpop.permute.xlu0 %916
        %920 = vset.pattern.permute.xlu0 0
        %921 = vperm.xlu0 %920, %v835
        %v922 = vpop.permute.xlu0 %921
        %925 = vset.pattern.permute.xlu0 0
        %926 = vperm.xlu0 %925, %v836
        %v927 = vpop.permute.xlu0 %926
        %930 = vset.pattern.permute.xlu0 0
        %931 = vperm.xlu0 %930, %v837
        %v932 = vpop.permute.xlu0 %931
        %935 = vset.pattern.permute.xlu0 0
        %936 = vperm.xlu0 %935, %v838
        %v937 = vpop.permute.xlu0 %936
        %940 = vset.pattern.permute.xlu0 0
        %941 = vperm.xlu0 %940, %v839
        %v942 = vpop.permute.xlu0 %941
        %945 = vset.pattern.permute.xlu0 0
        %946 = vperm.xlu0 %945, %v840
        %v947 = vpop.permute.xlu0 %946
        %950 = vset.pattern.permute.xlu0 0
        %951 = vperm.xlu0 %950, %v841
        %v952 = vpop.permute.xlu0 %951
        %955 = vset.pattern.permute.xlu0 0
        %956 = vperm.xlu0 %955, %v842
        %v957 = vpop.permute.xlu0 %956
        %960 = vset.pattern.permute.xlu0 0
        %961 = vperm.xlu0 %960, %v843
        %v962 = vpop.permute.xlu0 %961
        %965 = vset.pattern.permute.xlu0 0
        %966 = vperm.xlu0 %965, %v844
        %v967 = vpop.permute.xlu0 %966
        %970 = vset.pattern.permute.xlu0 0
        %971 = vperm.xlu0 %970, %v845
        %v972 = vpop.permute.xlu0 %971
        %975 = vset.pattern.permute.xlu0 0
        %976 = vperm.xlu0 %975, %v846
        %v977 = vpop.permute.xlu0 %976
        %980 = vset.pattern.permute.xlu0 0
        %981 = vperm.xlu0 %980, %v847
        %v982 = vpop.permute.xlu0 %981
        %985 = vset.pattern.permute.xlu0 0
        %986 = vperm.xlu0 %985, %v848
        %v987 = vpop.permute.xlu0 %986
        %990 = vset.pattern.permute.xlu0 0
        %991 = vperm.xlu0 %990, %v849
        %v992 = vpop.permute.xlu0 %991
        %995 = vset.pattern.permute.xlu0 0
        %996 = vperm.xlu0 %995, %v850
        %v997 = vpop.permute.xlu0 %996
        %1000 = vset.pattern.permute.xlu0 0
        %1001 = vperm.xlu0 %1000, %v851
        %v1002 = vpop.permute.xlu0 %1001
        %1005 = vset.pattern.permute.xlu0 0
        %1006 = vperm.xlu0 %1005, %v852
        %v1007 = vpop.permute.xlu0 %1006
        %1010 = vset.pattern.permute.xlu0 0
        %1011 = vperm.xlu0 %1010, %v853
        %v1012 = vpop.permute.xlu0 %1011
        %v1014 = vmul.f32 %v664, %v857
        %v1015 = vmul.f32 %v669, %v862
        %v1016 = vmul.f32 %v674, %v867
        %v1017 = vmul.f32 %v679, %v872
        %v1018 = vmul.f32 %v684, %v877
        %v1019 = vmul.f32 %v689, %v882
        %v1020 = vmul.f32 %v694, %v887
        %v1021 = vmul.f32 %v699, %v892
        %v1022 = vmul.f32 %v704, %v897
        %v1023 = vmul.f32 %v709, %v902
        %v1024 = vmul.f32 %v714, %v907
        %v1025 = vmul.f32 %v719, %v912
        %v1026 = vmul.f32 %v724, %v917
        %v1027 = vmul.f32 %v729, %v922
        %v1028 = vmul.f32 %v734, %v927
        %v1029 = vmul.f32 %v739, %v932
        %v1030 = vmul.f32 %v744, %v937
        %v1031 = vmul.f32 %v749, %v942
        %v1032 = vmul.f32 %v754, %v947
        %v1033 = vmul.f32 %v759, %v952
        %v1034 = vmul.f32 %v764, %v957
        %v1035 = vmul.f32 %v769, %v962
        %v1036 = vmul.f32 %v774, %v967
        %v1037 = vmul.f32 %v779, %v972
        %v1038 = vmul.f32 %v784, %v977
        %v1039 = vmul.f32 %v789, %v982
        %v1040 = vmul.f32 %v794, %v987
        %v1041 = vmul.f32 %v799, %v992
        %v1042 = vmul.f32 %v804, %v997
        %v1043 = vmul.f32 %v809, %v1002
        %v1044 = vmul.f32 %v814, %v1007
        %v1045 = vmul.f32 %v819, %v1012
        %1046 = vst [vmem:[%s177] sm:$0xff] %v1014
        %1047 = vst [vmem:[%s177 + $0x8] sm:$0xff] %v1015
        %1048 = vst [vmem:[%s177 + $0x10] sm:$0xff] %v1016
        %1049 = vst [vmem:[%s177 + $0x18] sm:$0xff] %v1017
        %1050 = vst [vmem:[%s177 + $0x20] sm:$0xff] %v1018
        %1051 = vst [vmem:[%s177 + $0x28] sm:$0xff] %v1019
        %1052 = vst [vmem:[%s177 + $0x30] sm:$0xff] %v1020
        %1053 = vst [vmem:[%s177 + $0x38] sm:$0xff] %v1021
        %1054 = vst [vmem:[%s177 + $0x40] sm:$0xff] %v1022
        %1055 = vst [vmem:[%s177 + $0x48] sm:$0xff] %v1023
        %1056 = vst [vmem:[%s177 + $0x50] sm:$0xff] %v1024
        %1057 = vst [vmem:[%s177 + $0x58] sm:$0xff] %v1025
        %1058 = vst [vmem:[%s177 + $0x60] sm:$0xff] %v1026
        %1059 = vst [vmem:[%s177 + $0x68] sm:$0xff] %v1027
        %1060 = vst [vmem:[%s177 + $0x70] sm:$0xff] %v1028
        %1061 = vst [vmem:[%s177 + $0x78] sm:$0xff] %v1029
        %1062 = vst [vmem:[%s177 + $0x80] sm:$0xff] %v1030
        %1063 = vst [vmem:[%s177 + $0x88] sm:$0xff] %v1031
        %1064 = vst [vmem:[%s177 + $0x90] sm:$0xff] %v1032
        %1065 = vst [vmem:[%s177 + $0x98] sm:$0xff] %v1033
        %1066 = vst [vmem:[%s177 + $0xa0] sm:$0xff] %v1034
        %1067 = vst [vmem:[%s177 + $0xa8] sm:$0xff] %v1035
        %1068 = vst [vmem:[%s177 + $0xb0] sm:$0xff] %v1036
        %1069 = vst [vmem:[%s177 + $0xb8] sm:$0xff] %v1037
        %1070 = vst [vmem:[%s177 + $0xc0] sm:$0xff] %v1038
        %1071 = vst [vmem:[%s177 + $0xc8] sm:$0xff] %v1039
        %1072 = vst [vmem:[%s177 + $0xd0] sm:$0xff] %v1040
        %1073 = vst [vmem:[%s177 + $0xd8] sm:$0xff] %v1041
        %1074 = vst [vmem:[%s177 + $0xe0] sm:$0xff] %v1042
        %1075 = vst [vmem:[%s177 + $0xe8] sm:$0xff] %v1043
        %1076 = vst [vmem:[%s177 + $0xf0] sm:$0xff] %v1044
        %1077 = vst [vmem:[%s177 + $0xf8] sm:$0xff] %v1045
        %s1078 = sand.u32 %s75, 1
        %s1079 = scalar_lea.sflag [#allocation4], %s1078
        %s1080 = sand.u32 %s75, 1
        %s1081 = smul.addr %s1080, 256
        %s1082 = scalar_lea.vmem [#allocation7], %s1081
        // Predicated region
        $region37: #{tpu_custom_call.1} parent=27 // pred_check
          %p1083 = pneg %p85
        $region38: #{tpu_custom_call.1} parent=27 // pred_check_branch
          %1085 = sbr.rel (%p1083) target = $region40
        $region39: #{tpu_custom_call.1} parent=27 // pred_region
          %s1086 = smul.u32 32, %s20
          %s1088 = ssub.s32 4096, 4096
          %1089 = vsyncadd %s1079, %s1088
          %s1090 = smul.addr %s1086, 128
          %s1091 = scalar_lea.hbm %s2, %s1090
          %s1092 = sshll.u32 %s1082, 4
          %s1093 = int_to_ptr.vmem [resolvable:$true] %s1092
          %1098 = dma.vmem_to_hbm [thread:$0]  %s1093, 4096, %s1091, %s1079, 128, 128, 8
        $region40: #{tpu_custom_call.1} parent=27 // pred_fallthru
          _
      $region28: #{tpu_custom_call.1} parent=5 // pred_fallthru
        _
      %p1099 = scmp.le.s32.totalorder 2, %s15
      // Predicated region
      $region41: #{tpu_custom_call.1} parent=5 // pred_check
        %p1100 = pneg %p1099
      $region42: #{tpu_custom_call.1} parent=5 // pred_check_branch
        %1102 = sbr.rel (%p1100) target = $region44
      $region43: #{tpu_custom_call.1} parent=5 // pred_region
        %s1103 = ssub.s32 %s15, 2
        // Predicated region
        $region45: #{tpu_custom_call.1} parent=43 // pred_check
          %p1104 = pneg %p91
        $region46: #{tpu_custom_call.1} parent=43 // pred_check_branch
          %1106 = sbr.rel (%p1104) target = $region48
        $region47: #{tpu_custom_call.1} parent=43 // pred_region
          %s1107 = sand.u32 %s76, 1
          %s1108 = scalar_lea.sflag [#allocation4], %s1107
          %s1109 = sand.u32 %s76, 1
          %s1110 = smul.addr %s1109, 256
          %s1111 = scalar_lea.vmem [#allocation7], %s1110
          %1112 = dma.done %s1108, 4096
        $region48: #{tpu_custom_call.1} parent=43 // pred_fallthru
          _
      $region44: #{tpu_custom_call.1} parent=5 // pred_fallthru
        _
    $region6: #{tpu_custom_call.1} parent=1 // loop_footer
      %s19 = sadd.s32 1, %s15
    $region7: #{tpu_custom_call.1} parent=1 // loop_footer_branch
      %14 = sbr.rel target = $region3
    $region8: #{tpu_custom_call.1} parent=1 // loop_exit
      _
    %1113 = vsyncpa [#allocation3], 1
    %s1114 = scalar_lea.sflag [#allocation3], 1
    %1115 = vsyncpa %s1114, 1
    %1116 = vsyncpa [#allocation6], 1
    %1117 = vsyncpa [#allocation4], 1
    %s1118 = scalar_lea.sflag [#allocation4], 1
    %1119 = vsyncpa %s1118, 1

</llo_original>
